<compile_context>
chip_gen: v6e
topology: v6e:2x2x1
jax: 0.10.0
libtpu: 0.0.40
codegen_flags: <defaults>
</compile_context>

<pallas_src>
import functools

import jax
import jax.numpy as jnp
from jax.experimental import pallas as pl
from jax.experimental.pallas import tpu as pltpu

LANES = 128          # lane width of the packed output rows
MAX_BLOCK_B = 4096   # batch rows per grid step (128 super-rows at A=4)


def policy_net_kernel(x_ref, w1_ref, b1_ref, w3_ref, b3_ref, seg_ref, o_ref):
    # fc1 + double tanh, in block-diagonal (packed super-row) form.
    h = jnp.dot(x_ref[...], w1_ref[...], preferred_element_type=jnp.float32)
    h = jnp.tanh(h + b1_ref[...])        # b1 is (1, G*64), broadcasts over rows
    h = jnp.tanh(h)                      # second tanh, exactly as in PyTorch
    # fc3 (block-diagonal): lane j*A + a holds logit a of packed batch row j.
    logits = jnp.dot(h, w3_ref[...], preferred_element_type=jnp.float32)
    logits = logits + b3_ref[...]
    # Softmax per group of A adjacent lanes.  Subtracting the *row* max is exact
    # (it is constant within every group) and keeps exp() in range: logits are
    # tanh-bounded (|logit| <= sum|w3| + |b3|), so the spread across the packed
    # batch rows sharing one 128-lane row stays far below f32 underflow.
    m = jnp.max(logits, axis=-1, keepdims=True)
    e = jnp.exp(logits - m)
    # Segment-sum matmul: denom[lane] = sum of e over that lane's action group
    # (pad lanes, if any, are singleton groups so denom stays nonzero).
    denom = jnp.dot(e, seg_ref[...], preferred_element_type=jnp.float32)
    # Exact reciprocal: each group sums to 1 to f32 precision (cheap here).
    o_ref[...] = (e * pl.reciprocal(denom)).astype(o_ref.dtype)


def _round_up(x, m):
    return (x + m - 1) // m * m


def prepare_params(w1, b1, w3, b3):
    """One-time repack of the Linear weights into block-diagonal, lane-packed form.

    w1: (8, 64), b1: (1, 64) or (64,), w3: (64, A), b3: (1, A) or (A,)
    Returns (w1_blk, b1_blk, w3_blk, b3_blk, seg) used by policy_network_forward.
    """
    f_in, hidden = w1.shape
    a = w3.shape[-1]
    assert a <= LANES  # TODO(synk): for actionSpace > 128 fall back to a lane-tiled output.
    g = LANES // a                      # batch rows packed per 128-lane output row
    ga = g * a                          # used lanes per output row
    eye = jnp.eye(g, dtype=w1.dtype)
    w1_blk = jnp.kron(eye, w1)                                        # (G*8, G*64)
    b1_blk = jnp.tile(jnp.reshape(b1, (1, hidden)), (1, g))           # (1, G*64)
    w3_blk = jnp.zeros((g * hidden, LANES), w3.dtype).at[:, :ga].set(
        jnp.kron(eye, w3))                                            # (G*64, 128)
    b3_blk = jnp.zeros((1, LANES), w3.dtype).at[:, :ga].set(
        jnp.tile(jnp.reshape(b3, (1, a)), (1, g)))                    # (1, 128)
    # Segment-sum matrix: lanes in the same action group sum together; pad lanes
    # (>= G*A, only present when A does not divide 128) are singleton groups.
    lane = jnp.arange(LANES)
    grp = jnp.where(lane < ga, lane // a, lane)
    seg = (grp[:, None] == grp[None, :]).astype(jnp.float32)          # (128, 128)
    return w1_blk, b1_blk, w3_blk, b3_blk, seg


@functools.partial(jax.jit, static_argnames=("action_space", "block_b"))
def policy_network_forward(state, w1_blk, b1_blk, w3_blk, b3_blk, seg,
                           *, action_space, block_b=MAX_BLOCK_B):
    """state: (B, 8) f32; returns (B, actionSpace) f32 softmax probabilities."""
    B, F = state.shape
    A = action_space
    G = LANES // A
    GA = G * A
    GF = G * F
    GH = w1_blk.shape[1]

    # Super-rows: each kernel output row packs G batch rows x A actions.
    n_sr = pl.cdiv(B, G)
    # Tile in super-rows: multiple of 8 sublanes, capped by block_b batch rows,
    # and >= 2 grid steps whenever possible so both v7x TensorCores get work.
    tbr_cap = max(8, block_b // G)
    tbr = min(tbr_cap, _round_up(pl.cdiv(n_sr, 2), 8))
    n_sr_pad = _round_up(n_sr, tbr)
    Bp = n_sr_pad * G

    # Skip the padding copy entirely when the batch is already tile aligned.
    if Bp != B:
        xp = jnp.zeros((Bp, F), state.dtype).at[:B, :].set(state)
    else:
        xp = state
    x_packed = xp.reshape(n_sr_pad, GF)          # contiguous -> free view change

    grid = (n_sr_pad // tbr,)
    out = pl.pallas_call(
        policy_net_kernel,
        out_shape=jax.ShapeDtypeStruct((n_sr_pad, LANES), jnp.float32),
        grid_spec=pltpu.PrefetchScalarGridSpec(
            num_scalar_prefetch=0,
            grid=grid,
            in_specs=[
                # packed states stream in (tbr, G*8) tiles; everything else is
                # resident (same block every grid step -> no re-DMA).
                pl.BlockSpec((tbr, GF), lambda i: (i, 0)),
                pl.BlockSpec((GF, GH), lambda i: (0, 0)),
                pl.BlockSpec((1, GH), lambda i: (0, 0)),
                pl.BlockSpec((GH, LANES), lambda i: (0, 0)),
                pl.BlockSpec((1, LANES), lambda i: (0, 0)),
                pl.BlockSpec((LANES, LANES), lambda i: (0, 0)),
            ],
            out_specs=pl.BlockSpec((tbr, LANES), lambda i: (i, 0)),
        ),
        compiler_params=pltpu.CompilerParams(
            # batch tiles are independent -> shard across TCs on v7x megacore
            dimension_semantics=("parallel",),
        ),
    )(x_packed, w1_blk, b1_blk, w3_blk, b3_blk, seg)

    # Unpack: (n_sr_pad, 128) -> (Bp, A).  For A dividing 128 this is a free
    # contiguous reshape (no lane slice); the row slice only runs when padded.
    if GA != LANES:
        out = out[:, :GA]
    probs = out.reshape(Bp, A)
    if Bp != B:
        probs = probs[:B]
    return probs


def init_params(key, action_space):
    """Deterministic init matching PyTorch Linear shapes (stored transposed)."""
    k1, k2, k3, k4 = jax.random.split(key, 4)
    # fc1: Linear(8, 64)  -> weight (64, 8) in torch; stored as (8, 64) here
    w1 = jax.random.uniform(k1, (8, 64), jnp.float32, -0.35, 0.35)
    b1 = jax.random.uniform(k2, (1, 64), jnp.float32, -0.35, 0.35)
    # fc3: Linear(64, actionSpace) -> stored as (64, actionSpace)
    w3 = jax.random.uniform(k3, (64, action_space), jnp.float32, -0.125, 0.125)
    b3 = jax.random.uniform(k4, (1, action_space), jnp.float32, -0.125, 0.125)
    # NOTE: fc2 (Linear(64, 64)) exists in __init__ but is unused in forward,
    # so it is intentionally not materialized here.
    return w1, b1, w3, b3


if __name__ == "__main__":
    key = jax.random.PRNGKey(0)
    action_space = 4

    kp, kx = jax.random.split(key)
    w1, b1, w3, b3 = init_params(kp, action_space)
    blk_params = prepare_params(w1, b1, w3, b3)   # one-time repack, outside jit

    # Small-shape sanity check (batch=2, single tile) and a multi-tile run
    # (batch=1024 -> 2 grid steps) exercising the packed / parallel path.
    for batch in (2, 1024):
        state = jax.random.normal(
            jax.random.fold_in(kx, batch), (batch, 8), jnp.float32)

        out = jax.block_until_ready(
            policy_network_forward(state, *blk_params,
                                   action_space=action_space))

        # Pure-JAX reference for the kernel semantics (double tanh + softmax).
        h_ref = jnp.tanh(jnp.tanh(state @ w1 + b1))
        ref = jax.nn.softmax(h_ref @ w3 + b3, axis=-1)

        assert out.shape == (batch, action_space)
        assert jnp.allclose(out, ref, atol=2e-3, rtol=2e-3)
        # exact reciprocal -> rows normalized to f32 precision
        assert jnp.allclose(jnp.sum(out, axis=-1), 1.0, atol=1e-4)

    print("KERNEL_OK")
</pallas_src>

<mosaic_0001>
module attributes {stable_mosaic.version = 11 : i64} {
  func.func @policy_net_kernel(%arg0: i32, %arg1: memref<8x256xf32, #tpu.memory_space<vmem>>, %arg2: memref<256x2048xf32, #tpu.memory_space<vmem>>, %arg3: memref<1x2048xf32, #tpu.memory_space<vmem>>, %arg4: memref<2048x128xf32, #tpu.memory_space<vmem>>, %arg5: memref<1x128xf32, #tpu.memory_space<vmem>>, %arg6: memref<128x128xf32, #tpu.memory_space<vmem>>, %arg7: memref<8x128xf32, #tpu.memory_space<vmem>>) attributes {dimension_semantics = [#tpu.dimension_semantics<parallel>], iteration_bounds = array<i64: 1>, scalar_prefetch = 0 : i64, scratch_operands = 0 : i64, tpu.core_type = #tpu.core_type<tc>, window_params = [{transform_indices = @transform_0, window_bounds = array<i64: 8, 256>}, {pipeline_mode = #tpu.pipeline_mode<synchronous>, transform_indices = @transform_1, window_bounds = array<i64: 256, 2048>}, {pipeline_mode = #tpu.pipeline_mode<synchronous>, transform_indices = @transform_2, window_bounds = array<i64: 1, 2048>}, {pipeline_mode = #tpu.pipeline_mode<synchronous>, transform_indices = @transform_3, window_bounds = array<i64: 2048, 128>}, {pipeline_mode = #tpu.pipeline_mode<synchronous>, transform_indices = @transform_4, window_bounds = array<i64: 1, 128>}, {pipeline_mode = #tpu.pipeline_mode<synchronous>, transform_indices = @transform_5, window_bounds = array<i64: 128, 128>}, {transform_indices = @transform_6, window_bounds = array<i64: 8, 128>}]} {
    %c0 = arith.constant 0 : index
    %c0_0 = arith.constant 0 : index
    %0 = vector.load %arg1[%c0, %c0_0] : memref<8x256xf32, #tpu.memory_space<vmem>>, vector<8x256xf32>
    %c0_1 = arith.constant 0 : index
    %c0_2 = arith.constant 0 : index
    %1 = vector.load %arg2[%c0_1, %c0_2] : memref<256x2048xf32, #tpu.memory_space<vmem>>, vector<256x2048xf32>
    %cst = arith.constant dense<0.000000e+00> : vector<8x2048xf32>
    %2 = tpu.matmul %0, %1, %cst {dimension_numbers = #tpu.dot_dimension_numbers<[1], [0], [0], [1], [0, 0, 1, 1], [], []>} : vector<8x256xf32>, vector<256x2048xf32>, vector<8x2048xf32> -> vector<8x2048xf32>
    %c0_3 = arith.constant 0 : index
    %c0_4 = arith.constant 0 : index
    %3 = vector.load %arg3[%c0_3, %c0_4] : memref<1x2048xf32, #tpu.memory_space<vmem>>, vector<1x2048xf32>
    %4 = vector.broadcast %3 : vector<1x2048xf32> to vector<8x2048xf32>
    %5 = arith.addf %2, %4 : vector<8x2048xf32>
    %6 = math.tanh %5 : vector<8x2048xf32>
    %7 = math.tanh %6 : vector<8x2048xf32>
    %c0_5 = arith.constant 0 : index
    %c0_6 = arith.constant 0 : index
    %8 = vector.load %arg4[%c0_5, %c0_6] : memref<2048x128xf32, #tpu.memory_space<vmem>>, vector<2048x128xf32>
    %cst_7 = arith.constant dense<0.000000e+00> : vector<8x128xf32>
    %9 = tpu.matmul %7, %8, %cst_7 {dimension_numbers = #tpu.dot_dimension_numbers<[1], [0], [0], [1], [0, 0, 1, 1], [], []>} : vector<8x2048xf32>, vector<2048x128xf32>, vector<8x128xf32> -> vector<8x128xf32>
    %c0_8 = arith.constant 0 : index
    %c0_9 = arith.constant 0 : index
    %10 = vector.load %arg5[%c0_8, %c0_9] : memref<1x128xf32, #tpu.memory_space<vmem>>, vector<1x128xf32>
    %11 = vector.broadcast %10 : vector<1x128xf32> to vector<8x128xf32>
    %12 = arith.addf %9, %11 : vector<8x128xf32>
    %cst_10 = arith.constant dense<0xFF800000> : vector<8xf32>
    %13 = vector.multi_reduction <maximumf>, %12, %cst_10 [1] : vector<8x128xf32> to vector<8xf32>
    %14 = vector.shape_cast %13 : vector<8xf32> to vector<8x1xf32>
    %15 = vector.broadcast %14 : vector<8x1xf32> to vector<8x128xf32>
    %16 = arith.subf %12, %15 : vector<8x128xf32>
    %17 = math.exp %16 : vector<8x128xf32>
    %c0_11 = arith.constant 0 : index
    %c0_12 = arith.constant 0 : index
    %18 = vector.load %arg6[%c0_11, %c0_12] : memref<128x128xf32, #tpu.memory_space<vmem>>, vector<128x128xf32>
    %cst_13 = arith.constant dense<0.000000e+00> : vector<8x128xf32>
    %19 = tpu.matmul %17, %18, %cst_13 {dimension_numbers = #tpu.dot_dimension_numbers<[1], [0], [0], [1], [0, 0, 1, 1], [], []>} : vector<8x128xf32>, vector<128x128xf32>, vector<8x128xf32> -> vector<8x128xf32>
    %20 = tpu.reciprocal %19 : vector<8x128xf32> -> vector<8x128xf32>
    %21 = arith.mulf %17, %20 : vector<8x128xf32>
    %c0_14 = arith.constant 0 : index
    %c0_15 = arith.constant 0 : index
    %22 = vector.load %arg7[%c0_14, %c0_15] : memref<8x128xf32, #tpu.memory_space<vmem>>, vector<8x128xf32>
    tpu.vector_store %arg7[%c0_14, %c0_15], %21 {strides = array<i32>} : memref<8x128xf32, #tpu.memory_space<vmem>>, vector<8x128xf32>,
    return
  }
  func.func @transform_0(%arg0: i32) -> (i32, i32) {
    %c0_i32 = arith.constant 0 : i32
    %c0_i32_0 = arith.constant 0 : i32
    return %arg0, %c0_i32 : i32, i32
  }
  func.func @transform_1(%arg0: i32) -> (i32, i32) {
    %c0_i32 = arith.constant 0 : i32
    %c0_i32_0 = arith.constant 0 : i32
    %c0_i32_1 = arith.constant 0 : i32
    return %c0_i32, %c0_i32_0 : i32, i32
  }
  func.func @transform_2(%arg0: i32) -> (i32, i32) {
    %c0_i32 = arith.constant 0 : i32
    %c0_i32_0 = arith.constant 0 : i32
    %c0_i32_1 = arith.constant 0 : i32
    return %c0_i32, %c0_i32_0 : i32, i32
  }
  func.func @transform_3(%arg0: i32) -> (i32, i32) {
    %c0_i32 = arith.constant 0 : i32
    %c0_i32_0 = arith.constant 0 : i32
    %c0_i32_1 = arith.constant 0 : i32
    return %c0_i32, %c0_i32_0 : i32, i32
  }
  func.func @transform_4(%arg0: i32) -> (i32, i32) {
    %c0_i32 = arith.constant 0 : i32
    %c0_i32_0 = arith.constant 0 : i32
    %c0_i32_1 = arith.constant 0 : i32
    return %c0_i32, %c0_i32_0 : i32, i32
  }
  func.func @transform_5(%arg0: i32) -> (i32, i32) {
    %c0_i32 = arith.constant 0 : i32
    %c0_i32_0 = arith.constant 0 : i32
    %c0_i32_1 = arith.constant 0 : i32
    return %c0_i32, %c0_i32_0 : i32, i32
  }
  func.func @transform_6(%arg0: i32) -> (i32, i32) {
    %c0_i32 = arith.constant 0 : i32
    %c0_i32_0 = arith.constant 0 : i32
    return %arg0, %c0_i32 : i32, i32
  }
}

</mosaic_0001>

<llo_original>
// kernel: policy_network_forward.1
$region0: #{policy_network_forward.1}
  #allocation0 [shape = 'u32[]', space=smem, size = 0x4, offset = 0x4, fixed_abs, tag = 'smem constant byte address 0x4 - core index']
  #allocation1 [shape = 'u32[144,128]{1,0:T(1,128)}', space=vmem, size = 0x12000, scoped, tag = 'internal scratch']
  %s0 = inlined_call_operand.vmem [shape: f32[8,256], index: 0, kind: input, shape index: {}]
  %s1 = inlined_call_operand.hbm [shape: f32[256,2048], index: 1, kind: input, shape index: {}]
  %s2 = inlined_call_operand.hbm [shape: f32[1,2048], index: 2, kind: input, shape index: {}]
  %s3 = inlined_call_operand.hbm [shape: f32[2048,128], index: 3, kind: input, shape index: {}]
  %s4 = inlined_call_operand.hbm [shape: f32[1,128], index: 4, kind: input, shape index: {}]
  %s5 = inlined_call_operand.hbm [shape: f32[128,128], index: 5, kind: input, shape index: {}]
  %s6 = inlined_call_operand.vmem [shape: f32[8,128], index: 6, kind: output, shape index: {}]
  %s7 = sld [smem:[#allocation0]]
  $region54: #{policy_network_forward.1} parent=0
    _
  %s9 = ssub.s32 1, %s7
  %s10 = scalar_select 0, %s9, %s7
  $region1: #{policy_network_forward.1} parent=0
    #allocation2 [shape = 'u8[2097152]{0}', space=vmem, size = 0x200000, scoped, tag = 'input window, operand 1, single buffered']
    #allocation3 [shape = 's32[1]{0}', space=sflag, size = 0x4, scoped, tag = 'scoped memory for policy_network_forward.1']
    #allocation4 [shape = 'u8[8192]{0}', space=vmem, size = 0x2000, scoped, tag = 'input window, operand 2, single buffered']
    #allocation5 [shape = 's32[1]{0}', space=sflag, size = 0x4, scoped, tag = 'scoped memory for policy_network_forward.1']
    #allocation6 [shape = 'u8[1048576]{0}', space=vmem, size = 0x100000, scoped, tag = 'input window, operand 3, single buffered']
    #allocation7 [shape = 'u8[512]{0}', space=vmem, size = 0x400, scoped, tag = 'input window, operand 4, single buffered']
    #allocation8 [shape = 's32[1]{0}', space=sflag, size = 0x4, scoped, tag = 'scoped memory for policy_network_forward.1']
    #allocation9 [shape = 'u8[65536]{0}', space=vmem, size = 0x10000, scoped, tag = 'input window, operand 5, single buffered']
    %11 = vsyncpa [#allocation3], 0
    %12 = vsyncpa [#allocation5], 0
    %13 = vsyncpa [#allocation8], 0
    // Predicated region
    $region2: #{policy_network_forward.1} parent=1 // pred_check
      _
    $region3: #{policy_network_forward.1} parent=1 // pred_check_branch
      %15 = sbr.rel (0) target = $region5
    $region4: #{policy_network_forward.1} parent=1 // pred_region
      _
    $region5: #{policy_network_forward.1} parent=1 // pred_fallthru
      _
    // Predicated region
    $region6: #{policy_network_forward.1} parent=1 // pred_check
      _
    $region7: #{policy_network_forward.1} parent=1 // pred_check_branch
      %17 = sbr.rel (0) target = $region9
    $region8: #{policy_network_forward.1} parent=1 // pred_region
      %s19 = ssub.s32 65536, 65536
      %20 = vsyncadd [#allocation3], %s19
      %s21 = sshll.u32 [#allocation2], 4
      %s22 = int_to_ptr.vmem [resolvable:$true] %s21
      %27 = dma.hbm_to_vmem [thread:$0]  %s1, 65536, %s22, [#allocation3], 2048, 2048, 128
    $region9: #{policy_network_forward.1} parent=1 // pred_fallthru
      _
    // Predicated region
    $region10: #{policy_network_forward.1} parent=1 // pred_check
      _
    $region11: #{policy_network_forward.1} parent=1 // pred_check_branch
      %29 = sbr.rel (0) target = $region13
    $region12: #{policy_network_forward.1} parent=1 // pred_region
      %s31 = ssub.s32 256, 256
      %32 = vsyncadd [#allocation5], %s31
      %s34 = sshll.u32 [#allocation4], 4
      %s35 = int_to_ptr.vmem [resolvable:$true] %s34
      %37 = dma.hbm_to_vmem [thread:$0]  %s2, 256, %s35, [#allocation5]
    $region13: #{policy_network_forward.1} parent=1 // pred_fallthru
      _
    // Predicated region
    $region14: #{policy_network_forward.1} parent=1 // pred_check
      _
    $region15: #{policy_network_forward.1} parent=1 // pred_check_branch
      %39 = sbr.rel (0) target = $region17
    $region16: #{policy_network_forward.1} parent=1 // pred_region
      %s41 = ssub.s32 32768, 32768
      %42 = vsyncadd [#allocation5], %s41
      %s43 = sshll.u32 [#allocation6], 4
      %s44 = int_to_ptr.vmem [resolvable:$true] %s43
      %49 = dma.hbm_to_vmem [thread:$0]  %s3, 32768, %s44, [#allocation5], 128, 128, 8
    $region17: #{policy_network_forward.1} parent=1 // pred_fallthru
      _
    // Predicated region
    $region18: #{policy_network_forward.1} parent=1 // pred_check
      _
    $region19: #{policy_network_forward.1} parent=1 // pred_check_branch
      %51 = sbr.rel (0) target = $region21
    $region20: #{policy_network_forward.1} parent=1 // pred_region
      %s53 = ssub.s32 16, 16
      %54 = vsyncadd [#allocation8], %s53
      %s56 = sshll.u32 [#allocation7], 4
      %s57 = int_to_ptr.vmem [resolvable:$true] %s56
      %59 = dma.hbm_to_vmem [thread:$0]  %s4, 16, %s57, [#allocation8]
    $region21: #{policy_network_forward.1} parent=1 // pred_fallthru
      _
    // Predicated region
    $region22: #{policy_network_forward.1} parent=1 // pred_check
      _
    $region23: #{policy_network_forward.1} parent=1 // pred_check_branch
      %61 = sbr.rel (0) target = $region25
    $region24: #{policy_network_forward.1} parent=1 // pred_region
      %s63 = ssub.s32 2048, 2048
      %64 = vsyncadd [#allocation8], %s63
      %s65 = sshll.u32 [#allocation9], 4
      %s66 = int_to_ptr.vmem [resolvable:$true] %s65
      %71 = dma.hbm_to_vmem [thread:$0]  %s5, 2048, %s66, [#allocation8], 128, 128, 8
    $region25: #{policy_network_forward.1} parent=1 // pred_fallthru
      _
    // Predicated region
    $region26: #{policy_network_forward.1} parent=1 // pred_check
      _
    $region27: #{policy_network_forward.1} parent=1 // pred_check_branch
      %73 = sbr.rel (0) target = $region29
    $region28: #{policy_network_forward.1} parent=1 // pred_region
      %74 = dma.done [#allocation3], 65536
    $region29: #{policy_network_forward.1} parent=1 // pred_fallthru
      _
    // Predicated region
    $region30: #{policy_network_forward.1} parent=1 // pred_check
      _
    $region31: #{policy_network_forward.1} parent=1 // pred_check_branch
      %76 = sbr.rel (0) target = $region33
    $region32: #{policy_network_forward.1} parent=1 // pred_region
      %77 = dma.done [#allocation5], 256
    $region33: #{policy_network_forward.1} parent=1 // pred_fallthru
      _
    // Predicated region
    $region34: #{policy_network_forward.1} parent=1 // pred_check
      _
    $region35: #{policy_network_forward.1} parent=1 // pred_check_branch
      %79 = sbr.rel (0) target = $region37
    $region36: #{policy_network_forward.1} parent=1 // pred_region
      %80 = dma.done [#allocation5], 32768
    $region37: #{policy_network_forward.1} parent=1 // pred_fallthru
      _
    // Predicated region
    $region38: #{policy_network_forward.1} parent=1 // pred_check
      _
    $region39: #{policy_network_forward.1} parent=1 // pred_check_branch
      %82 = sbr.rel (0) target = $region41
    $region40: #{policy_network_forward.1} parent=1 // pred_region
      %83 = dma.done [#allocation8], 16
    $region41: #{policy_network_forward.1} parent=1 // pred_fallthru
      _
    // Predicated region
    $region42: #{policy_network_forward.1} parent=1 // pred_check
      _
    $region43: #{policy_network_forward.1} parent=1 // pred_check_branch
      %85 = sbr.rel (0) target = $region45
    $region44: #{policy_network_forward.1} parent=1 // pred_region
      %86 = dma.done [#allocation8], 2048
    $region45: #{policy_network_forward.1} parent=1 // pred_fallthru
      _
    %v87 = vld [vmem:[%s0] sm:$0xff]
    %v88 = vld [vmem:[%s0 + $0x8] sm:$0xff]
    %v89 = vld [vmem:[#allocation2] sm:$0xff]
    %v90 = vld [vmem:[#allocation2 + $0x8] sm:$0xff]
    %v91 = vld [vmem:[#allocation2 + $0x10] sm:$0xff]
    %v92 = vld [vmem:[#allocation2 + $0x18] sm:$0xff]
    %v93 = vld [vmem:[#allocation2 + $0x20] sm:$0xff]
    %v94 = vld [vmem:[#allocation2 + $0x28] sm:$0xff]
    %v95 = vld [vmem:[#allocation2 + $0x30] sm:$0xff]
    %v96 = vld [vmem:[#allocation2 + $0x38] sm:$0xff]
    %v97 = vld [vmem:[#allocation2 + $0x40] sm:$0xff]
    %v98 = vld [vmem:[#allocation2 + $0x48] sm:$0xff]
    %v99 = vld [vmem:[#allocation2 + $0x50] sm:$0xff]
    %v100 = vld [vmem:[#allocation2 + $0x58] sm:$0xff]
    %v101 = vld [vmem:[#allocation2 + $0x60] sm:$0xff]
    %v102 = vld [vmem:[#allocation2 + $0x68] sm:$0xff]
    %v103 = vld [vmem:[#allocation2 + $0x70] sm:$0xff]
    %v104 = vld [vmem:[#allocation2 + $0x78] sm:$0xff]
    %v105 = vld [vmem:[#allocation2 + $0x80] sm:$0xff]
    %v106 = vld [vmem:[#allocation2 + $0x88] sm:$0xff]
    %v107 = vld [vmem:[#allocation2 + $0x90] sm:$0xff]
    %v108 = vld [vmem:[#allocation2 + $0x98] sm:$0xff]
    %v109 = vld [vmem:[#allocation2 + $0xa0] sm:$0xff]
    %v110 = vld [vmem:[#allocation2 + $0xa8] sm:$0xff]
    %v111 = vld [vmem:[#allocation2 + $0xb0] sm:$0xff]
    %v112 = vld [vmem:[#allocation2 + $0xb8] sm:$0xff]
    %v113 = vld [vmem:[#allocation2 + $0xc0] sm:$0xff]
    %v114 = vld [vmem:[#allocation2 + $0xc8] sm:$0xff]
    %v115 = vld [vmem:[#allocation2 + $0xd0] sm:$0xff]
    %v116 = vld [vmem:[#allocation2 + $0xd8] sm:$0xff]
    %v117 = vld [vmem:[#allocation2 + $0xe0] sm:$0xff]
    %v118 = vld [vmem:[#allocation2 + $0xe8] sm:$0xff]
    %v119 = vld [vmem:[#allocation2 + $0xf0] sm:$0xff]
    %v120 = vld [vmem:[#allocation2 + $0xf8] sm:$0xff]
    %v121 = vld [vmem:[#allocation2 + $0x100] sm:$0xff]
    %v122 = vld [vmem:[#allocation2 + $0x108] sm:$0xff]
    %v123 = vld [vmem:[#allocation2 + $0x110] sm:$0xff]
    %v124 = vld [vmem:[#allocation2 + $0x118] sm:$0xff]
    %v125 = vld [vmem:[#allocation2 + $0x120] sm:$0xff]
    %v126 = vld [vmem:[#allocation2 + $0x128] sm:$0xff]
    %v127 = vld [vmem:[#allocation2 + $0x130] sm:$0xff]
    %v128 = vld [vmem:[#allocation2 + $0x138] sm:$0xff]
    %v129 = vld [vmem:[#allocation2 + $0x140] sm:$0xff]
    %v130 = vld [vmem:[#allocation2 + $0x148] sm:$0xff]
    %v131 = vld [vmem:[#allocation2 + $0x150] sm:$0xff]
    %v132 = vld [vmem:[#allocation2 + $0x158] sm:$0xff]
    %v133 = vld [vmem:[#allocation2 + $0x160] sm:$0xff]
    %v134 = vld [vmem:[#allocation2 + $0x168] sm:$0xff]
    %v135 = vld [vmem:[#allocation2 + $0x170] sm:$0xff]
    %v136 = vld [vmem:[#allocation2 + $0x178] sm:$0xff]
    %v137 = vld [vmem:[#allocation2 + $0x180] sm:$0xff]
    %v138 = vld [vmem:[#allocation2 + $0x188] sm:$0xff]
    %v139 = vld [vmem:[#allocation2 + $0x190] sm:$0xff]
    %v140 = vld [vmem:[#allocation2 + $0x198] sm:$0xff]
    %v141 = vld [vmem:[#allocation2 + $0x1a0] sm:$0xff]
    %v142 = vld [vmem:[#allocation2 + $0x1a8] sm:$0xff]
    %v143 = vld [vmem:[#allocation2 + $0x1b0] sm:$0xff]
    %v144 = vld [vmem:[#allocation2 + $0x1b8] sm:$0xff]
    %v145 = vld [vmem:[#allocation2 + $0x1c0] sm:$0xff]
    %v146 = vld [vmem:[#allocation2 + $0x1c8] sm:$0xff]
    %v147 = vld [vmem:[#allocation2 + $0x1d0] sm:$0xff]
    %v148 = vld [vmem:[#allocation2 + $0x1d8] sm:$0xff]
    %v149 = vld [vmem:[#allocation2 + $0x1e0] sm:$0xff]
    %v150 = vld [vmem:[#allocation2 + $0x1e8] sm:$0xff]
    %v151 = vld [vmem:[#allocation2 + $0x1f0] sm:$0xff]
    %v152 = vld [vmem:[#allocation2 + $0x1f8] sm:$0xff]
    %v153 = vld [vmem:[#allocation2 + $0x200] sm:$0xff]
    %v154 = vld [vmem:[#allocation2 + $0x208] sm:$0xff]
    %v155 = vld [vmem:[#allocation2 + $0x210] sm:$0xff]
    %v156 = vld [vmem:[#allocation2 + $0x218] sm:$0xff]
    %v157 = vld [vmem:[#allocation2 + $0x220] sm:$0xff]
    %v158 = vld [vmem:[#allocation2 + $0x228] sm:$0xff]
    %v159 = vld [vmem:[#allocation2 + $0x230] sm:$0xff]
    %v160 = vld [vmem:[#allocation2 + $0x238] sm:$0xff]
    %v161 = vld [vmem:[#allocation2 + $0x240] sm:$0xff]
    %v162 = vld [vmem:[#allocation2 + $0x248] sm:$0xff]
    %v163 = vld [vmem:[#allocation2 + $0x250] sm:$0xff]
    %v164 = vld [vmem:[#allocation2 + $0x258] sm:$0xff]
    %v165 = vld [vmem:[#allocation2 + $0x260] sm:$0xff]
    %v166 = vld [vmem:[#allocation2 + $0x268] sm:$0xff]
    %v167 = vld [vmem:[#allocation2 + $0x270] sm:$0xff]
    %v168 = vld [vmem:[#allocation2 + $0x278] sm:$0xff]
    %v169 = vld [vmem:[#allocation2 + $0x280] sm:$0xff]
    %v170 = vld [vmem:[#allocation2 + $0x288] sm:$0xff]
    %v171 = vld [vmem:[#allocation2 + $0x290] sm:$0xff]
    %v172 = vld [vmem:[#allocation2 + $0x298] sm:$0xff]
    %v173 = vld [vmem:[#allocation2 + $0x2a0] sm:$0xff]
    %v174 = vld [vmem:[#allocation2 + $0x2a8] sm:$0xff]
    %v175 = vld [vmem:[#allocation2 + $0x2b0] sm:$0xff]
    %v176 = vld [vmem:[#allocation2 + $0x2b8] sm:$0xff]
    %v177 = vld [vmem:[#allocation2 + $0x2c0] sm:$0xff]
    %v178 = vld [vmem:[#allocation2 + $0x2c8] sm:$0xff]
    %v179 = vld [vmem:[#allocation2 + $0x2d0] sm:$0xff]
    %v180 = vld [vmem:[#allocation2 + $0x2d8] sm:$0xff]
    %v181 = vld [vmem:[#allocation2 + $0x2e0] sm:$0xff]
    %v182 = vld [vmem:[#allocation2 + $0x2e8] sm:$0xff]
    %v183 = vld [vmem:[#allocation2 + $0x2f0] sm:$0xff]
    %v184 = vld [vmem:[#allocation2 + $0x2f8] sm:$0xff]
    %v185 = vld [vmem:[#allocation2 + $0x300] sm:$0xff]
    %v186 = vld [vmem:[#allocation2 + $0x308] sm:$0xff]
    %v187 = vld [vmem:[#allocation2 + $0x310] sm:$0xff]
    %v188 = vld [vmem:[#allocation2 + $0x318] sm:$0xff]
    %v189 = vld [vmem:[#allocation2 + $0x320] sm:$0xff]
    %v190 = vld [vmem:[#allocation2 + $0x328] sm:$0xff]
    %v191 = vld [vmem:[#allocation2 + $0x330] sm:$0xff]
    %v192 = vld [vmem:[#allocation2 + $0x338] sm:$0xff]
    %v193 = vld [vmem:[#allocation2 + $0x340] sm:$0xff]
    %v194 = vld [vmem:[#allocation2 + $0x348] sm:$0xff]
    %v195 = vld [vmem:[#allocation2 + $0x350] sm:$0xff]
    %v196 = vld [vmem:[#allocation2 + $0x358] sm:$0xff]
    %v197 = vld [vmem:[#allocation2 + $0x360] sm:$0xff]
    %v198 = vld [vmem:[#allocation2 + $0x368] sm:$0xff]
    %v199 = vld [vmem:[#allocation2 + $0x370] sm:$0xff]
    %v200 = vld [vmem:[#allocation2 + $0x378] sm:$0xff]
    %v201 = vld [vmem:[#allocation2 + $0x380] sm:$0xff]
    %v202 = vld [vmem:[#allocation2 + $0x388] sm:$0xff]
    %v203 = vld [vmem:[#allocation2 + $0x390] sm:$0xff]
    %v204 = vld [vmem:[#allocation2 + $0x398] sm:$0xff]
    %v205 = vld [vmem:[#allocation2 + $0x3a0] sm:$0xff]
    %v206 = vld [vmem:[#allocation2 + $0x3a8] sm:$0xff]
    %v207 = vld [vmem:[#allocation2 + $0x3b0] sm:$0xff]
    %v208 = vld [vmem:[#allocation2 + $0x3b8] sm:$0xff]
    %v209 = vld [vmem:[#allocation2 + $0x3c0] sm:$0xff]
    %v210 = vld [vmem:[#allocation2 + $0x3c8] sm:$0xff]
    %v211 = vld [vmem:[#allocation2 + $0x3d0] sm:$0xff]
    %v212 = vld [vmem:[#allocation2 + $0x3d8] sm:$0xff]
    %v213 = vld [vmem:[#allocation2 + $0x3e0] sm:$0xff]
    %v214 = vld [vmem:[#allocation2 + $0x3e8] sm:$0xff]
    %v215 = vld [vmem:[#allocation2 + $0x3f0] sm:$0xff]
    %v216 = vld [vmem:[#allocation2 + $0x3f8] sm:$0xff]
    %v217 = vld [vmem:[#allocation2 + $0x400] sm:$0xff]
    %v218 = vld [vmem:[#allocation2 + $0x408] sm:$0xff]
    %v219 = vld [vmem:[#allocation2 + $0x410] sm:$0xff]
    %v220 = vld [vmem:[#allocation2 + $0x418] sm:$0xff]
    %v221 = vld [vmem:[#allocation2 + $0x420] sm:$0xff]
    %v222 = vld [vmem:[#allocation2 + $0x428] sm:$0xff]
    %v223 = vld [vmem:[#allocation2 + $0x430] sm:$0xff]
    %v224 = vld [vmem:[#allocation2 + $0x438] sm:$0xff]
    %v225 = vld [vmem:[#allocation2 + $0x440] sm:$0xff]
    %v226 = vld [vmem:[#allocation2 + $0x448] sm:$0xff]
    %v227 = vld [vmem:[#allocation2 + $0x450] sm:$0xff]
    %v228 = vld [vmem:[#allocation2 + $0x458] sm:$0xff]
    %v229 = vld [vmem:[#allocation2 + $0x460] sm:$0xff]
    %v230 = vld [vmem:[#allocation2 + $0x468] sm:$0xff]
    %v231 = vld [vmem:[#allocation2 + $0x470] sm:$0xff]
    %v232 = vld [vmem:[#allocation2 + $0x478] sm:$0xff]
    %v233 = vld [vmem:[#allocation2 + $0x480] sm:$0xff]
    %v234 = vld [vmem:[#allocation2 + $0x488] sm:$0xff]
    %v235 = vld [vmem:[#allocation2 + $0x490] sm:$0xff]
    %v236 = vld [vmem:[#allocation2 + $0x498] sm:$0xff]
    %v237 = vld [vmem:[#allocation2 + $0x4a0] sm:$0xff]
    %v238 = vld [vmem:[#allocation2 + $0x4a8] sm:$0xff]
    %v239 = vld [vmem:[#allocation2 + $0x4b0] sm:$0xff]
    %v240 = vld [vmem:[#allocation2 + $0x4b8] sm:$0xff]
    %v241 = vld [vmem:[#allocation2 + $0x4c0] sm:$0xff]
    %v242 = vld [vmem:[#allocation2 + $0x4c8] sm:$0xff]
    %v243 = vld [vmem:[#allocation2 + $0x4d0] sm:$0xff]
    %v244 = vld [vmem:[#allocation2 + $0x4d8] sm:$0xff]
    %v245 = vld [vmem:[#allocation2 + $0x4e0] sm:$0xff]
    %v246 = vld [vmem:[#allocation2 + $0x4e8] sm:$0xff]
    %v247 = vld [vmem:[#allocation2 + $0x4f0] sm:$0xff]
    %v248 = vld [vmem:[#allocation2 + $0x4f8] sm:$0xff]
    %v249 = vld [vmem:[#allocation2 + $0x500] sm:$0xff]
    %v250 = vld [vmem:[#allocation2 + $0x508] sm:$0xff]
    %v251 = vld [vmem:[#allocation2 + $0x510] sm:$0xff]
    %v252 = vld [vmem:[#allocation2 + $0x518] sm:$0xff]
    %v253 = vld [vmem:[#allocation2 + $0x520] sm:$0xff]
    %v254 = vld [vmem:[#allocation2 + $0x528] sm:$0xff]
    %v255 = vld [vmem:[#allocation2 + $0x530] sm:$0xff]
    %v256 = vld [vmem:[#allocation2 + $0x538] sm:$0xff]
    %v257 = vld [vmem:[#allocation2 + $0x540] sm:$0xff]
    %v258 = vld [vmem:[#allocation2 + $0x548] sm:$0xff]
    %v259 = vld [vmem:[#allocation2 + $0x550] sm:$0xff]
    %v260 = vld [vmem:[#allocation2 + $0x558] sm:$0xff]
    %v261 = vld [vmem:[#allocation2 + $0x560] sm:$0xff]
    %v262 = vld [vmem:[#allocation2 + $0x568] sm:$0xff]
    %v263 = vld [vmem:[#allocation2 + $0x570] sm:$0xff]
    %v264 = vld [vmem:[#allocation2 + $0x578] sm:$0xff]
    %v265 = vld [vmem:[#allocation2 + $0x580] sm:$0xff]
    %v266 = vld [vmem:[#allocation2 + $0x588] sm:$0xff]
    %v267 = vld [vmem:[#allocation2 + $0x590] sm:$0xff]
    %v268 = vld [vmem:[#allocation2 + $0x598] sm:$0xff]
    %v269 = vld [vmem:[#allocation2 + $0x5a0] sm:$0xff]
    %v270 = vld [vmem:[#allocation2 + $0x5a8] sm:$0xff]
    %v271 = vld [vmem:[#allocation2 + $0x5b0] sm:$0xff]
    %v272 = vld [vmem:[#allocation2 + $0x5b8] sm:$0xff]
    %v273 = vld [vmem:[#allocation2 + $0x5c0] sm:$0xff]
    %v274 = vld [vmem:[#allocation2 + $0x5c8] sm:$0xff]
    %v275 = vld [vmem:[#allocation2 + $0x5d0] sm:$0xff]
    %v276 = vld [vmem:[#allocation2 + $0x5d8] sm:$0xff]
    %v277 = vld [vmem:[#allocation2 + $0x5e0] sm:$0xff]
    %v278 = vld [vmem:[#allocation2 + $0x5e8] sm:$0xff]
    %v279 = vld [vmem:[#allocation2 + $0x5f0] sm:$0xff]
    %v280 = vld [vmem:[#allocation2 + $0x5f8] sm:$0xff]
    %v281 = vld [vmem:[#allocation2 + $0x600] sm:$0xff]
    %v282 = vld [vmem:[#allocation2 + $0x608] sm:$0xff]
    %v283 = vld [vmem:[#allocation2 + $0x610] sm:$0xff]
    %v284 = vld [vmem:[#allocation2 + $0x618] sm:$0xff]
    %v285 = vld [vmem:[#allocation2 + $0x620] sm:$0xff]
    %v286 = vld [vmem:[#allocation2 + $0x628] sm:$0xff]
    %v287 = vld [vmem:[#allocation2 + $0x630] sm:$0xff]
    %v288 = vld [vmem:[#allocation2 + $0x638] sm:$0xff]
    %v289 = vld [vmem:[#allocation2 + $0x640] sm:$0xff]
    %v290 = vld [vmem:[#allocation2 + $0x648] sm:$0xff]
    %v291 = vld [vmem:[#allocation2 + $0x650] sm:$0xff]
    %v292 = vld [vmem:[#allocation2 + $0x658] sm:$0xff]
    %v293 = vld [vmem:[#allocation2 + $0x660] sm:$0xff]
    %v294 = vld [vmem:[#allocation2 + $0x668] sm:$0xff]
    %v295 = vld [vmem:[#allocation2 + $0x670] sm:$0xff]
    %v296 = vld [vmem:[#allocation2 + $0x678] sm:$0xff]
    %v297 = vld [vmem:[#allocation2 + $0x680] sm:$0xff]
    %v298 = vld [vmem:[#allocation2 + $0x688] sm:$0xff]
    %v299 = vld [vmem:[#allocation2 + $0x690] sm:$0xff]
    %v300 = vld [vmem:[#allocation2 + $0x698] sm:$0xff]
    %v301 = vld [vmem:[#allocation2 + $0x6a0] sm:$0xff]
    %v302 = vld [vmem:[#allocation2 + $0x6a8] sm:$0xff]
    %v303 = vld [vmem:[#allocation2 + $0x6b0] sm:$0xff]
    %v304 = vld [vmem:[#allocation2 + $0x6b8] sm:$0xff]
    %v305 = vld [vmem:[#allocation2 + $0x6c0] sm:$0xff]
    %v306 = vld [vmem:[#allocation2 + $0x6c8] sm:$0xff]
    %v307 = vld [vmem:[#allocation2 + $0x6d0] sm:$0xff]
    %v308 = vld [vmem:[#allocation2 + $0x6d8] sm:$0xff]
    %v309 = vld [vmem:[#allocation2 + $0x6e0] sm:$0xff]
    %v310 = vld [vmem:[#allocation2 + $0x6e8] sm:$0xff]
    %v311 = vld [vmem:[#allocation2 + $0x6f0] sm:$0xff]
    %v312 = vld [vmem:[#allocation2 + $0x6f8] sm:$0xff]
    %v313 = vld [vmem:[#allocation2 + $0x700] sm:$0xff]
    %v314 = vld [vmem:[#allocation2 + $0x708] sm:$0xff]
    %v315 = vld [vmem:[#allocation2 + $0x710] sm:$0xff]
    %v316 = vld [vmem:[#allocation2 + $0x718] sm:$0xff]
    %v317 = vld [vmem:[#allocation2 + $0x720] sm:$0xff]
    %v318 = vld [vmem:[#allocation2 + $0x728] sm:$0xff]
    %v319 = vld [vmem:[#allocation2 + $0x730] sm:$0xff]
    %v320 = vld [vmem:[#allocation2 + $0x738] sm:$0xff]
    %v321 = vld [vmem:[#allocation2 + $0x740] sm:$0xff]
    %v322 = vld [vmem:[#allocation2 + $0x748] sm:$0xff]
    %v323 = vld [vmem:[#allocation2 + $0x750] sm:$0xff]
    %v324 = vld [vmem:[#allocation2 + $0x758] sm:$0xff]
    %v325 = vld [vmem:[#allocation2 + $0x760] sm:$0xff]
    %v326 = vld [vmem:[#allocation2 + $0x768] sm:$0xff]
    %v327 = vld [vmem:[#allocation2 + $0x770] sm:$0xff]
    %v328 = vld [vmem:[#allocation2 + $0x778] sm:$0xff]
    %v329 = vld [vmem:[#allocation2 + $0x780] sm:$0xff]
    %v330 = vld [vmem:[#allocation2 + $0x788] sm:$0xff]
    %v331 = vld [vmem:[#allocation2 + $0x790] sm:$0xff]
    %v332 = vld [vmem:[#allocation2 + $0x798] sm:$0xff]
    %v333 = vld [vmem:[#allocation2 + $0x7a0] sm:$0xff]
    %v334 = vld [vmem:[#allocation2 + $0x7a8] sm:$0xff]
    %v335 = vld [vmem:[#allocation2 + $0x7b0] sm:$0xff]
    %v336 = vld [vmem:[#allocation2 + $0x7b8] sm:$0xff]
    %v337 = vld [vmem:[#allocation2 + $0x7c0] sm:$0xff]
    %v338 = vld [vmem:[#allocation2 + $0x7c8] sm:$0xff]
    %v339 = vld [vmem:[#allocation2 + $0x7d0] sm:$0xff]
    %v340 = vld [vmem:[#allocation2 + $0x7d8] sm:$0xff]
    %v341 = vld [vmem:[#allocation2 + $0x7e0] sm:$0xff]
    %v342 = vld [vmem:[#allocation2 + $0x7e8] sm:$0xff]
    %v343 = vld [vmem:[#allocation2 + $0x7f0] sm:$0xff]
    %v344 = vld [vmem:[#allocation2 + $0x7f8] sm:$0xff]
    %v345 = vld [vmem:[#allocation2 + $0x800] sm:$0xff]
    %v346 = vld [vmem:[#allocation2 + $0x808] sm:$0xff]
    %v347 = vld [vmem:[#allocation2 + $0x810] sm:$0xff]
    %v348 = vld [vmem:[#allocation2 + $0x818] sm:$0xff]
    %v349 = vld [vmem:[#allocation2 + $0x820] sm:$0xff]
    %v350 = vld [vmem:[#allocation2 + $0x828] sm:$0xff]
    %v351 = vld [vmem:[#allocation2 + $0x830] sm:$0xff]
    %v352 = vld [vmem:[#allocation2 + $0x838] sm:$0xff]
    %v353 = vld [vmem:[#allocation2 + $0x840] sm:$0xff]
    %v354 = vld [vmem:[#allocation2 + $0x848] sm:$0xff]
    %v355 = vld [vmem:[#allocation2 + $0x850] sm:$0xff]
    %v356 = vld [vmem:[#allocation2 + $0x858] sm:$0xff]
    %v357 = vld [vmem:[#allocation2 + $0x860] sm:$0xff]
    %v358 = vld [vmem:[#allocation2 + $0x868] sm:$0xff]
    %v359 = vld [vmem:[#allocation2 + $0x870] sm:$0xff]
    %v360 = vld [vmem:[#allocation2 + $0x878] sm:$0xff]
    %v361 = vld [vmem:[#allocation2 + $0x880] sm:$0xff]
    %v362 = vld [vmem:[#allocation2 + $0x888] sm:$0xff]
    %v363 = vld [vmem:[#allocation2 + $0x890] sm:$0xff]
    %v364 = vld [vmem:[#allocation2 + $0x898] sm:$0xff]
    %v365 = vld [vmem:[#allocation2 + $0x8a0] sm:$0xff]
    %v366 = vld [vmem:[#allocation2 + $0x8a8] sm:$0xff]
    %v367 = vld [vmem:[#allocation2 + $0x8b0] sm:$0xff]
    %v368 = vld [vmem:[#allocation2 + $0x8b8] sm:$0xff]
    %v369 = vld [vmem:[#allocation2 + $0x8c0] sm:$0xff]
    %v370 = vld [vmem:[#allocation2 + $0x8c8] sm:$0xff]
    %v371 = vld [vmem:[#allocation2 + $0x8d0] sm:$0xff]
    %v372 = vld [vmem:[#allocation2 + $0x8d8] sm:$0xff]
    %v373 = vld [vmem:[#allocation2 + $0x8e0] sm:$0xff]
    %v374 = vld [vmem:[#allocation2 + $0x8e8] sm:$0xff]
    %v375 = vld [vmem:[#allocation2 + $0x8f0] sm:$0xff]
    %v376 = vld [vmem:[#allocation2 + $0x8f8] sm:$0xff]
    %v377 = vld [vmem:[#allocation2 + $0x900] sm:$0xff]
    %v378 = vld [vmem:[#allocation2 + $0x908] sm:$0xff]
    %v379 = vld [vmem:[#allocation2 + $0x910] sm:$0xff]
    %v380 = vld [vmem:[#allocation2 + $0x918] sm:$0xff]
    %v381 = vld [vmem:[#allocation2 + $0x920] sm:$0xff]
    %v382 = vld [vmem:[#allocation2 + $0x928] sm:$0xff]
    %v383 = vld [vmem:[#allocation2 + $0x930] sm:$0xff]
    %v384 = vld [vmem:[#allocation2 + $0x938] sm:$0xff]
    %v385 = vld [vmem:[#allocation2 + $0x940] sm:$0xff]
    %v386 = vld [vmem:[#allocation2 + $0x948] sm:$0xff]
    %v387 = vld [vmem:[#allocation2 + $0x950] sm:$0xff]
    %v388 = vld [vmem:[#allocation2 + $0x958] sm:$0xff]
    %v389 = vld [vmem:[#allocation2 + $0x960] sm:$0xff]
    %v390 = vld [vmem:[#allocation2 + $0x968] sm:$0xff]
    %v391 = vld [vmem:[#allocation2 + $0x970] sm:$0xff]
    %v392 = vld [vmem:[#allocation2 + $0x978] sm:$0xff]
    %v393 = vld [vmem:[#allocation2 + $0x980] sm:$0xff]
    %v394 = vld [vmem:[#allocation2 + $0x988] sm:$0xff]
    %v395 = vld [vmem:[#allocation2 + $0x990] sm:$0xff]
    %v396 = vld [vmem:[#allocation2 + $0x998] sm:$0xff]
    %v397 = vld [vmem:[#allocation2 + $0x9a0] sm:$0xff]
    %v398 = vld [vmem:[#allocation2 + $0x9a8] sm:$0xff]
    %v399 = vld [vmem:[#allocation2 + $0x9b0] sm:$0xff]
    %v400 = vld [vmem:[#allocation2 + $0x9b8] sm:$0xff]
    %v401 = vld [vmem:[#allocation2 + $0x9c0] sm:$0xff]
    %v402 = vld [vmem:[#allocation2 + $0x9c8] sm:$0xff]
    %v403 = vld [vmem:[#allocation2 + $0x9d0] sm:$0xff]
    %v404 = vld [vmem:[#allocation2 + $0x9d8] sm:$0xff]
    %v405 = vld [vmem:[#allocation2 + $0x9e0] sm:$0xff]
    %v406 = vld [vmem:[#allocation2 + $0x9e8] sm:$0xff]
    %v407 = vld [vmem:[#allocation2 + $0x9f0] sm:$0xff]
    %v408 = vld [vmem:[#allocation2 + $0x9f8] sm:$0xff]
    %v409 = vld [vmem:[#allocation2 + $0xa00] sm:$0xff]
    %v410 = vld [vmem:[#allocation2 + $0xa08] sm:$0xff]
    %v411 = vld [vmem:[#allocation2 + $0xa10] sm:$0xff]
    %v412 = vld [vmem:[#allocation2 + $0xa18] sm:$0xff]
    %v413 = vld [vmem:[#allocation2 + $0xa20] sm:$0xff]
    %v414 = vld [vmem:[#allocation2 + $0xa28] sm:$0xff]
    %v415 = vld [vmem:[#allocation2 + $0xa30] sm:$0xff]
    %v416 = vld [vmem:[#allocation2 + $0xa38] sm:$0xff]
    %v417 = vld [vmem:[#allocation2 + $0xa40] sm:$0xff]
    %v418 = vld [vmem:[#allocation2 + $0xa48] sm:$0xff]
    %v419 = vld [vmem:[#allocation2 + $0xa50] sm:$0xff]
    %v420 = vld [vmem:[#allocation2 + $0xa58] sm:$0xff]
    %v421 = vld [vmem:[#allocation2 + $0xa60] sm:$0xff]
    %v422 = vld [vmem:[#allocation2 + $0xa68] sm:$0xff]
    %v423 = vld [vmem:[#allocation2 + $0xa70] sm:$0xff]
    %v424 = vld [vmem:[#allocation2 + $0xa78] sm:$0xff]
    %v425 = vld [vmem:[#allocation2 + $0xa80] sm:$0xff]
    %v426 = vld [vmem:[#allocation2 + $0xa88] sm:$0xff]
    %v427 = vld [vmem:[#allocation2 + $0xa90] sm:$0xff]
    %v428 = vld [vmem:[#allocation2 + $0xa98] sm:$0xff]
    %v429 = vld [vmem:[#allocation2 + $0xaa0] sm:$0xff]
    %v430 = vld [vmem:[#allocation2 + $0xaa8] sm:$0xff]
    %v431 = vld [vmem:[#allocation2 + $0xab0] sm:$0xff]
    %v432 = vld [vmem:[#allocation2 + $0xab8] sm:$0xff]
    %v433 = vld [vmem:[#allocation2 + $0xac0] sm:$0xff]
    %v434 = vld [vmem:[#allocation2 + $0xac8] sm:$0xff]
    %v435 = vld [vmem:[#allocation2 + $0xad0] sm:$0xff]
    %v436 = vld [vmem:[#allocation2 + $0xad8] sm:$0xff]
    %v437 = vld [vmem:[#allocation2 + $0xae0] sm:$0xff]
    %v438 = vld [vmem:[#allocation2 + $0xae8] sm:$0xff]
    %v439 = vld [vmem:[#allocation2 + $0xaf0] sm:$0xff]
    %v440 = vld [vmem:[#allocation2 + $0xaf8] sm:$0xff]
    %v441 = vld [vmem:[#allocation2 + $0xb00] sm:$0xff]
    %v442 = vld [vmem:[#allocation2 + $0xb08] sm:$0xff]
    %v443 = vld [vmem:[#allocation2 + $0xb10] sm:$0xff]
    %v444 = vld [vmem:[#allocation2 + $0xb18] sm:$0xff]
    %v445 = vld [vmem:[#allocation2 + $0xb20] sm:$0xff]
    %v446 = vld [vmem:[#allocation2 + $0xb28] sm:$0xff]
    %v447 = vld [vmem:[#allocation2 + $0xb30] sm:$0xff]
    %v448 = vld [vmem:[#allocation2 + $0xb38] sm:$0xff]
    %v449 = vld [vmem:[#allocation2 + $0xb40] sm:$0xff]
    %v450 = vld [vmem:[#allocation2 + $0xb48] sm:$0xff]
    %v451 = vld [vmem:[#allocation2 + $0xb50] sm:$0xff]
    %v452 = vld [vmem:[#allocation2 + $0xb58] sm:$0xff]
    %v453 = vld [vmem:[#allocation2 + $0xb60] sm:$0xff]
    %v454 = vld [vmem:[#allocation2 + $0xb68] sm:$0xff]
    %v455 = vld [vmem:[#allocation2 + $0xb70] sm:$0xff]
    %v456 = vld [vmem:[#allocation2 + $0xb78] sm:$0xff]
    %v457 = vld [vmem:[#allocation2 + $0xb80] sm:$0xff]
    %v458 = vld [vmem:[#allocation2 + $0xb88] sm:$0xff]
    %v459 = vld [vmem:[#allocation2 + $0xb90] sm:$0xff]
    %v460 = vld [vmem:[#allocation2 + $0xb98] sm:$0xff]
    %v461 = vld [vmem:[#allocation2 + $0xba0] sm:$0xff]
    %v462 = vld [vmem:[#allocation2 + $0xba8] sm:$0xff]
    %v463 = vld [vmem:[#allocation2 + $0xbb0] sm:$0xff]
    %v464 = vld [vmem:[#allocation2 + $0xbb8] sm:$0xff]
    %v465 = vld [vmem:[#allocation2 + $0xbc0] sm:$0xff]
    %v466 = vld [vmem:[#allocation2 + $0xbc8] sm:$0xff]
    %v467 = vld [vmem:[#allocation2 + $0xbd0] sm:$0xff]
    %v468 = vld [vmem:[#allocation2 + $0xbd8] sm:$0xff]
    %v469 = vld [vmem:[#allocation2 + $0xbe0] sm:$0xff]
    %v470 = vld [vmem:[#allocation2 + $0xbe8] sm:$0xff]
    %v471 = vld [vmem:[#allocation2 + $0xbf0] sm:$0xff]
    %v472 = vld [vmem:[#allocation2 + $0xbf8] sm:$0xff]
    %v473 = vld [vmem:[#allocation2 + $0xc00] sm:$0xff]
    %v474 = vld [vmem:[#allocation2 + $0xc08] sm:$0xff]
    %v475 = vld [vmem:[#allocation2 + $0xc10] sm:$0xff]
    %v476 = vld [vmem:[#allocation2 + $0xc18] sm:$0xff]
    %v477 = vld [vmem:[#allocation2 + $0xc20] sm:$0xff]
    %v478 = vld [vmem:[#allocation2 + $0xc28] sm:$0xff]
    %v479 = vld [vmem:[#allocation2 + $0xc30] sm:$0xff]
    %v480 = vld [vmem:[#allocation2 + $0xc38] sm:$0xff]
    %v481 = vld [vmem:[#allocation2 + $0xc40] sm:$0xff]
    %v482 = vld [vmem:[#allocation2 + $0xc48] sm:$0xff]
    %v483 = vld [vmem:[#allocation2 + $0xc50] sm:$0xff]
    %v484 = vld [vmem:[#allocation2 + $0xc58] sm:$0xff]
    %v485 = vld [vmem:[#allocation2 + $0xc60] sm:$0xff]
    %v486 = vld [vmem:[#allocation2 + $0xc68] sm:$0xff]
    %v487 = vld [vmem:[#allocation2 + $0xc70] sm:$0xff]
    %v488 = vld [vmem:[#allocation2 + $0xc78] sm:$0xff]
    %v489 = vld [vmem:[#allocation2 + $0xc80] sm:$0xff]
    %v490 = vld [vmem:[#allocation2 + $0xc88] sm:$0xff]
    %v491 = vld [vmem:[#allocation2 + $0xc90] sm:$0xff]
    %v492 = vld [vmem:[#allocation2 + $0xc98] sm:$0xff]
    %v493 = vld [vmem:[#allocation2 + $0xca0] sm:$0xff]
    %v494 = vld [vmem:[#allocation2 + $0xca8] sm:$0xff]
    %v495 = vld [vmem:[#allocation2 + $0xcb0] sm:$0xff]
    %v496 = vld [vmem:[#allocation2 + $0xcb8] sm:$0xff]
    %v497 = vld [vmem:[#allocation2 + $0xcc0] sm:$0xff]
    %v498 = vld [vmem:[#allocation2 + $0xcc8] sm:$0xff]
    %v499 = vld [vmem:[#allocation2 + $0xcd0] sm:$0xff]
    %v500 = vld [vmem:[#allocation2 + $0xcd8] sm:$0xff]
    %v501 = vld [vmem:[#allocation2 + $0xce0] sm:$0xff]
    %v502 = vld [vmem:[#allocation2 + $0xce8] sm:$0xff]
    %v503 = vld [vmem:[#allocation2 + $0xcf0] sm:$0xff]
    %v504 = vld [vmem:[#allocation2 + $0xcf8] sm:$0xff]
    %v505 = vld [vmem:[#allocation2 + $0xd00] sm:$0xff]
    %v506 = vld [vmem:[#allocation2 + $0xd08] sm:$0xff]
    %v507 = vld [vmem:[#allocation2 + $0xd10] sm:$0xff]
    %v508 = vld [vmem:[#allocation2 + $0xd18] sm:$0xff]
    %v509 = vld [vmem:[#allocation2 + $0xd20] sm:$0xff]
    %v510 = vld [vmem:[#allocation2 + $0xd28] sm:$0xff]
    %v511 = vld [vmem:[#allocation2 + $0xd30] sm:$0xff]
    %v512 = vld [vmem:[#allocation2 + $0xd38] sm:$0xff]
    %v513 = vld [vmem:[#allocation2 + $0xd40] sm:$0xff]
    %v514 = vld [vmem:[#allocation2 + $0xd48] sm:$0xff]
    %v515 = vld [vmem:[#allocation2 + $0xd50] sm:$0xff]
    %v516 = vld [vmem:[#allocation2 + $0xd58] sm:$0xff]
    %v517 = vld [vmem:[#allocation2 + $0xd60] sm:$0xff]
    %v518 = vld [vmem:[#allocation2 + $0xd68] sm:$0xff]
    %v519 = vld [vmem:[#allocation2 + $0xd70] sm:$0xff]
    %v520 = vld [vmem:[#allocation2 + $0xd78] sm:$0xff]
    %v521 = vld [vmem:[#allocation2 + $0xd80] sm:$0xff]
    %v522 = vld [vmem:[#allocation2 + $0xd88] sm:$0xff]
    %v523 = vld [vmem:[#allocation2 + $0xd90] sm:$0xff]
    %v524 = vld [vmem:[#allocation2 + $0xd98] sm:$0xff]
    %v525 = vld [vmem:[#allocation2 + $0xda0] sm:$0xff]
    %v526 = vld [vmem:[#allocation2 + $0xda8] sm:$0xff]
    %v527 = vld [vmem:[#allocation2 + $0xdb0] sm:$0xff]
    %v528 = vld [vmem:[#allocation2 + $0xdb8] sm:$0xff]
    %v529 = vld [vmem:[#allocation2 + $0xdc0] sm:$0xff]
    %v530 = vld [vmem:[#allocation2 + $0xdc8] sm:$0xff]
    %v531 = vld [vmem:[#allocation2 + $0xdd0] sm:$0xff]
    %v532 = vld [vmem:[#allocation2 + $0xdd8] sm:$0xff]
    %v533 = vld [vmem:[#allocation2 + $0xde0] sm:$0xff]
    %v534 = vld [vmem:[#allocation2 + $0xde8] sm:$0xff]
    %v535 = vld [vmem:[#allocation2 + $0xdf0] sm:$0xff]
    %v536 = vld [vmem:[#allocation2 + $0xdf8] sm:$0xff]
    %v537 = vld [vmem:[#allocation2 + $0xe00] sm:$0xff]
    %v538 = vld [vmem:[#allocation2 + $0xe08] sm:$0xff]
    %v539 = vld [vmem:[#allocation2 + $0xe10] sm:$0xff]
    %v540 = vld [vmem:[#allocation2 + $0xe18] sm:$0xff]
    %v541 = vld [vmem:[#allocation2 + $0xe20] sm:$0xff]
    %v542 = vld [vmem:[#allocation2 + $0xe28] sm:$0xff]
    %v543 = vld [vmem:[#allocation2 + $0xe30] sm:$0xff]
    %v544 = vld [vmem:[#allocation2 + $0xe38] sm:$0xff]
    %v545 = vld [vmem:[#allocation2 + $0xe40] sm:$0xff]
    %v546 = vld [vmem:[#allocation2 + $0xe48] sm:$0xff]
    %v547 = vld [vmem:[#allocation2 + $0xe50] sm:$0xff]
    %v548 = vld [vmem:[#allocation2 + $0xe58] sm:$0xff]
    %v549 = vld [vmem:[#allocation2 + $0xe60] sm:$0xff]
    %v550 = vld [vmem:[#allocation2 + $0xe68] sm:$0xff]
    %v551 = vld [vmem:[#allocation2 + $0xe70] sm:$0xff]
    %v552 = vld [vmem:[#allocation2 + $0xe78] sm:$0xff]
    %v553 = vld [vmem:[#allocation2 + $0xe80] sm:$0xff]
    %v554 = vld [vmem:[#allocation2 + $0xe88] sm:$0xff]
    %v555 = vld [vmem:[#allocation2 + $0xe90] sm:$0xff]
    %v556 = vld [vmem:[#allocation2 + $0xe98] sm:$0xff]
    %v557 = vld [vmem:[#allocation2 + $0xea0] sm:$0xff]
    %v558 = vld [vmem:[#allocation2 + $0xea8] sm:$0xff]
    %v559 = vld [vmem:[#allocation2 + $0xeb0] sm:$0xff]
    %v560 = vld [vmem:[#allocation2 + $0xeb8] sm:$0xff]
    %v561 = vld [vmem:[#allocation2 + $0xec0] sm:$0xff]
    %v562 = vld [vmem:[#allocation2 + $0xec8] sm:$0xff]
    %v563 = vld [vmem:[#allocation2 + $0xed0] sm:$0xff]
    %v564 = vld [vmem:[#allocation2 + $0xed8] sm:$0xff]
    %v565 = vld [vmem:[#allocation2 + $0xee0] sm:$0xff]
    %v566 = vld [vmem:[#allocation2 + $0xee8] sm:$0xff]
    %v567 = vld [vmem:[#allocation2 + $0xef0] sm:$0xff]
    %v568 = vld [vmem:[#allocation2 + $0xef8] sm:$0xff]
    %v569 = vld [vmem:[#allocation2 + $0xf00] sm:$0xff]
    %v570 = vld [vmem:[#allocation2 + $0xf08] sm:$0xff]
    %v571 = vld [vmem:[#allocation2 + $0xf10] sm:$0xff]
    %v572 = vld [vmem:[#allocation2 + $0xf18] sm:$0xff]
    %v573 = vld [vmem:[#allocation2 + $0xf20] sm:$0xff]
    %v574 = vld [vmem:[#allocation2 + $0xf28] sm:$0xff]
    %v575 = vld [vmem:[#allocation2 + $0xf30] sm:$0xff]
    %v576 = vld [vmem:[#allocation2 + $0xf38] sm:$0xff]
    %v577 = vld [vmem:[#allocation2 + $0xf40] sm:$0xff]
    %v578 = vld [vmem:[#allocation2 + $0xf48] sm:$0xff]
    %v579 = vld [vmem:[#allocation2 + $0xf50] sm:$0xff]
    %v580 = vld [vmem:[#allocation2 + $0xf58] sm:$0xff]
    %v581 = vld [vmem:[#allocation2 + $0xf60] sm:$0xff]
    %v582 = vld [vmem:[#allocation2 + $0xf68] sm:$0xff]
    %v583 = vld [vmem:[#allocation2 + $0xf70] sm:$0xff]
    %v584 = vld [vmem:[#allocation2 + $0xf78] sm:$0xff]
    %v585 = vld [vmem:[#allocation2 + $0xf80] sm:$0xff]
    %v586 = vld [vmem:[#allocation2 + $0xf88] sm:$0xff]
    %v587 = vld [vmem:[#allocation2 + $0xf90] sm:$0xff]
    %v588 = vld [vmem:[#allocation2 + $0xf98] sm:$0xff]
    %v589 = vld [vmem:[#allocation2 + $0xfa0] sm:$0xff]
    %v590 = vld [vmem:[#allocation2 + $0xfa8] sm:$0xff]
    %v591 = vld [vmem:[#allocation2 + $0xfb0] sm:$0xff]
    %v592 = vld [vmem:[#allocation2 + $0xfb8] sm:$0xff]
    %v593 = vld [vmem:[#allocation2 + $0xfc0] sm:$0xff]
    %v594 = vld [vmem:[#allocation2 + $0xfc8] sm:$0xff]
    %v595 = vld [vmem:[#allocation2 + $0xfd0] sm:$0xff]
    %v596 = vld [vmem:[#allocation2 + $0xfd8] sm:$0xff]
    %v597 = vld [vmem:[#allocation2 + $0xfe0] sm:$0xff]
    %v598 = vld [vmem:[#allocation2 + $0xfe8] sm:$0xff]
    %v599 = vld [vmem:[#allocation2 + $0xff0] sm:$0xff]
    %v600 = vld [vmem:[#allocation2 + $0xff8] sm:$0xff]
    %v601 = vld [vmem:[#allocation4] sm:$0xff]
    %v602 = vld [vmem:[#allocation4 + $0x8] sm:$0xff]
    %v605 = vlaneseq
    %v606 = vshrl.u32 %v605, 7
    %v607 = vsub.s32 0, %v606
    %v608 = vrot.slane %v601, %v607
    %v609 = vlaneseq
    %v610 = vshrl.u32 %v609, 7
    %v611 = vsub.s32 1, %v610
    %v612 = vrot.slane %v601, %v611
    %v613 = vlaneseq
    %v614 = vshrl.u32 %v613, 7
    %v615 = vsub.s32 2, %v614
    %v616 = vrot.slane %v601, %v615
    %v617 = vlaneseq
    %v618 = vshrl.u32 %v617, 7
    %v619 = vsub.s32 3, %v618
    %v620 = vrot.slane %v601, %v619
    %v621 = vlaneseq
    %v622 = vshrl.u32 %v621, 7
    %v623 = vsub.s32 4, %v622
    %v624 = vrot.slane %v601, %v623
    %v625 = vlaneseq
    %v626 = vshrl.u32 %v625, 7
    %v627 = vsub.s32 5, %v626
    %v628 = vrot.slane %v601, %v627
    %v629 = vlaneseq
    %v630 = vshrl.u32 %v629, 7
    %v631 = vsub.s32 6, %v630
    %v632 = vrot.slane %v601, %v631
    %v633 = vlaneseq
    %v634 = vshrl.u32 %v633, 7
    %v635 = vsub.s32 7, %v634
    %v636 = vrot.slane %v601, %v635
    %v637 = vlaneseq
    %v638 = vshrl.u32 %v637, 7
    %v639 = vsub.s32 0, %v638
    %v640 = vrot.slane %v602, %v639
    %v641 = vlaneseq
    %v642 = vshrl.u32 %v641, 7
    %v643 = vsub.s32 1, %v642
    %v644 = vrot.slane %v602, %v643
    %v645 = vlaneseq
    %v646 = vshrl.u32 %v645, 7
    %v647 = vsub.s32 2, %v646
    %v648 = vrot.slane %v602, %v647
    %v649 = vlaneseq
    %v650 = vshrl.u32 %v649, 7
    %v651 = vsub.s32 3, %v650
    %v652 = vrot.slane %v602, %v651
    %v653 = vlaneseq
    %v654 = vshrl.u32 %v653, 7
    %v655 = vsub.s32 4, %v654
    %v656 = vrot.slane %v602, %v655
    %v657 = vlaneseq
    %v658 = vshrl.u32 %v657, 7
    %v659 = vsub.s32 5, %v658
    %v660 = vrot.slane %v602, %v659
    %v661 = vlaneseq
    %v662 = vshrl.u32 %v661, 7
    %v663 = vsub.s32 6, %v662
    %v664 = vrot.slane %v602, %v663
    %v665 = vlaneseq
    %v666 = vshrl.u32 %v665, 7
    %v667 = vsub.s32 7, %v666
    %v668 = vrot.slane %v602, %v667
    %685 = vmatprep.subr.mxu0 %v330
    %686 = vmatpush1.msra.mxu0 %v329
    %687 = vmatprep.subr.mxu0 %v314
    %688 = vmatpush1.msra.mxu0 %v313
    %689 = vmatprep.subr.mxu0 %v298
    %690 = vmatpush1.msra.mxu0 %v297
    %691 = vmatprep.subr.mxu0 %v282
    %692 = vmatpush1.msra.mxu0 %v281
    %693 = vmatprep.subr.mxu0 %v266
    %694 = vmatpush1.msra.mxu0 %v265
    %695 = vmatprep.subr.mxu0 %v250
    %696 = vmatpush1.msra.mxu0 %v249
    %697 = vmatprep.subr.mxu0 %v234
    %698 = vmatpush1.msra.mxu0 %v233
    %699 = vmatprep.subr.mxu0 %v218
    %700 = vmatpush1.msra.mxu0 %v217
    %701 = vmatprep.subr.mxu0 %v202
    %702 = vmatpush1.msra.mxu0 %v201
    %703 = vmatprep.subr.mxu0 %v186
    %704 = vmatpush1.msra.mxu0 %v185
    %705 = vmatprep.subr.mxu0 %v170
    %706 = vmatpush1.msra.mxu0 %v169
    %707 = vmatprep.subr.mxu0 %v154
    %708 = vmatpush1.msra.mxu0 %v153
    %709 = vmatprep.subr.mxu0 %v138
    %710 = vmatpush1.msra.mxu0 %v137
    %711 = vmatprep.subr.mxu0 %v122
    %712 = vmatpush1.msra.mxu0 %v121
    %713 = vmatprep.subr.mxu0 %v106
    %714 = vmatpush1.msra.mxu0 %v105
    %715 = vmatprep.subr.mxu0 %v90
    %716 = vmatpush1.msra.mxu0 %v89
    %717 = vmatprep.subr.mxu0 %v586
    %718 = vmatpush2.msra.mxu0 %v585
    %719 = vmatprep.subr.mxu0 %v570
    %720 = vmatpush2.msra.mxu0 %v569
    %721 = vmatprep.subr.mxu0 %v554
    %722 = vmatpush2.msra.mxu0 %v553
    %723 = vmatprep.subr.mxu0 %v538
    %724 = vmatpush2.msra.mxu0 %v537
    %725 = vmatprep.subr.mxu0 %v522
    %726 = vmatpush2.msra.mxu0 %v521
    %727 = vmatprep.subr.mxu0 %v506
    %728 = vmatpush2.msra.mxu0 %v505
    %729 = vmatprep.subr.mxu0 %v490
    %730 = vmatpush2.msra.mxu0 %v489
    %731 = vmatprep.subr.mxu0 %v474
    %732 = vmatpush2.msra.mxu0 %v473
    %733 = vmatprep.subr.mxu0 %v458
    %734 = vmatpush2.msra.mxu0 %v457
    %735 = vmatprep.subr.mxu0 %v442
    %736 = vmatpush2.msra.mxu0 %v441
    %737 = vmatprep.subr.mxu0 %v426
    %738 = vmatpush2.msra.mxu0 %v425
    %739 = vmatprep.subr.mxu0 %v410
    %740 = vmatpush2.msra.mxu0 %v409
    %741 = vmatprep.subr.mxu0 %v394
    %742 = vmatpush2.msra.mxu0 %v393
    %743 = vmatprep.subr.mxu0 %v378
    %744 = vmatpush2.msra.mxu0 %v377
    %745 = vmatprep.subr.mxu0 %v362
    %746 = vmatpush2.msra.mxu0 %v361
    %747 = vmatprep.subr.mxu0 %v346
    %748 = vmatpush2.msra.mxu0 %v345
    %749 = vmatprep.mubr.f32.mxu0 %v88
    %750 = vmatmul.mubr.f32.gmra.mxu0 %v87
    %v751 = vpop.f32.mrf.mxu0
    %v752 = vadd.f32 %v608, %v751
    %v753 = vpop.f32.mrf.mxu0
    %v754 = vadd.f32 %v612, %v753
    %755 = vdwg.mxu0
    %756 = vmatprep.subr.mxu0 %v332
    %757 = vmatpush1.msra.mxu0 %v331
    %758 = vmatprep.subr.mxu0 %v316
    %759 = vmatpush1.msra.mxu0 %v315
    %760 = vmatprep.subr.mxu0 %v300
    %761 = vmatpush1.msra.mxu0 %v299
    %762 = vmatprep.subr.mxu0 %v284
    %763 = vmatpush1.msra.mxu0 %v283
    %764 = vmatprep.subr.mxu0 %v268
    %765 = vmatpush1.msra.mxu0 %v267
    %766 = vmatprep.subr.mxu0 %v252
    %767 = vmatpush1.msra.mxu0 %v251
    %768 = vmatprep.subr.mxu0 %v236
    %769 = vmatpush1.msra.mxu0 %v235
    %770 = vmatprep.subr.mxu0 %v220
    %771 = vmatpush1.msra.mxu0 %v219
    %772 = vmatprep.subr.mxu0 %v204
    %773 = vmatpush1.msra.mxu0 %v203
    %774 = vmatprep.subr.mxu0 %v188
    %775 = vmatpush1.msra.mxu0 %v187
    %776 = vmatprep.subr.mxu0 %v172
    %777 = vmatpush1.msra.mxu0 %v171
    %778 = vmatprep.subr.mxu0 %v156
    %779 = vmatpush1.msra.mxu0 %v155
    %780 = vmatprep.subr.mxu0 %v140
    %781 = vmatpush1.msra.mxu0 %v139
    %782 = vmatprep.subr.mxu0 %v124
    %783 = vmatpush1.msra.mxu0 %v123
    %784 = vmatprep.subr.mxu0 %v108
    %785 = vmatpush1.msra.mxu0 %v107
    %786 = vmatprep.subr.mxu0 %v92
    %787 = vmatpush1.msra.mxu0 %v91
    %788 = vmatprep.subr.mxu0 %v588
    %789 = vmatpush2.msra.mxu0 %v587
    %790 = vmatprep.subr.mxu0 %v572
    %791 = vmatpush2.msra.mxu0 %v571
    %792 = vmatprep.subr.mxu0 %v556
    %793 = vmatpush2.msra.mxu0 %v555
    %794 = vmatprep.subr.mxu0 %v540
    %795 = vmatpush2.msra.mxu0 %v539
    %796 = vmatprep.subr.mxu0 %v524
    %797 = vmatpush2.msra.mxu0 %v523
    %798 = vmatprep.subr.mxu0 %v508
    %799 = vmatpush2.msra.mxu0 %v507
    %800 = vmatprep.subr.mxu0 %v492
    %801 = vmatpush2.msra.mxu0 %v491
    %802 = vmatprep.subr.mxu0 %v476
    %803 = vmatpush2.msra.mxu0 %v475
    %804 = vmatprep.subr.mxu0 %v460
    %805 = vmatpush2.msra.mxu0 %v459
    %806 = vmatprep.subr.mxu0 %v444
    %807 = vmatpush2.msra.mxu0 %v443
    %808 = vmatprep.subr.mxu0 %v428
    %809 = vmatpush2.msra.mxu0 %v427
    %810 = vmatprep.subr.mxu0 %v412
    %811 = vmatpush2.msra.mxu0 %v411
    %812 = vmatprep.subr.mxu0 %v396
    %813 = vmatpush2.msra.mxu0 %v395
    %814 = vmatprep.subr.mxu0 %v380
    %815 = vmatpush2.msra.mxu0 %v379
    %816 = vmatprep.subr.mxu0 %v364
    %817 = vmatpush2.msra.mxu0 %v363
    %818 = vmatprep.subr.mxu0 %v348
    %819 = vmatpush2.msra.mxu0 %v347
    %820 = vmatprep.mubr.f32.mxu0 %v88
    %821 = vmatmul.mubr.f32.gmra.mxu0 %v87
    %v822 = vpop.f32.mrf.mxu0
    %v823 = vadd.f32 %v616, %v822
    %v824 = vpop.f32.mrf.mxu0
    %v825 = vadd.f32 %v620, %v824
    %826 = vdwg.mxu0
    %827 = vmatprep.subr.mxu0 %v334
    %828 = vmatpush1.msra.mxu0 %v333
    %829 = vmatprep.subr.mxu0 %v318
    %830 = vmatpush1.msra.mxu0 %v317
    %831 = vmatprep.subr.mxu0 %v302
    %832 = vmatpush1.msra.mxu0 %v301
    %833 = vmatprep.subr.mxu0 %v286
    %834 = vmatpush1.msra.mxu0 %v285
    %835 = vmatprep.subr.mxu0 %v270
    %836 = vmatpush1.msra.mxu0 %v269
    %837 = vmatprep.subr.mxu0 %v254
    %838 = vmatpush1.msra.mxu0 %v253
    %839 = vmatprep.subr.mxu0 %v238
    %840 = vmatpush1.msra.mxu0 %v237
    %841 = vmatprep.subr.mxu0 %v222
    %842 = vmatpush1.msra.mxu0 %v221
    %843 = vmatprep.subr.mxu0 %v206
    %844 = vmatpush1.msra.mxu0 %v205
    %845 = vmatprep.subr.mxu0 %v190
    %846 = vmatpush1.msra.mxu0 %v189
    %847 = vmatprep.subr.mxu0 %v174
    %848 = vmatpush1.msra.mxu0 %v173
    %849 = vmatprep.subr.mxu0 %v158
    %850 = vmatpush1.msra.mxu0 %v157
    %851 = vmatprep.subr.mxu0 %v142
    %852 = vmatpush1.msra.mxu0 %v141
    %853 = vmatprep.subr.mxu0 %v126
    %854 = vmatpush1.msra.mxu0 %v125
    %855 = vmatprep.subr.mxu0 %v110
    %856 = vmatpush1.msra.mxu0 %v109
    %857 = vmatprep.subr.mxu0 %v94
    %858 = vmatpush1.msra.mxu0 %v93
    %859 = vmatprep.subr.mxu0 %v590
    %860 = vmatpush2.msra.mxu0 %v589
    %861 = vmatprep.subr.mxu0 %v574
    %862 = vmatpush2.msra.mxu0 %v573
    %863 = vmatprep.subr.mxu0 %v558
    %864 = vmatpush2.msra.mxu0 %v557
    %865 = vmatprep.subr.mxu0 %v542
    %866 = vmatpush2.msra.mxu0 %v541
    %867 = vmatprep.subr.mxu0 %v526
    %868 = vmatpush2.msra.mxu0 %v525
    %869 = vmatprep.subr.mxu0 %v510
    %870 = vmatpush2.msra.mxu0 %v509
    %871 = vmatprep.subr.mxu0 %v494
    %872 = vmatpush2.msra.mxu0 %v493
    %873 = vmatprep.subr.mxu0 %v478
    %874 = vmatpush2.msra.mxu0 %v477
    %875 = vmatprep.subr.mxu0 %v462
    %876 = vmatpush2.msra.mxu0 %v461
    %877 = vmatprep.subr.mxu0 %v446
    %878 = vmatpush2.msra.mxu0 %v445
    %879 = vmatprep.subr.mxu0 %v430
    %880 = vmatpush2.msra.mxu0 %v429
    %881 = vmatprep.subr.mxu0 %v414
    %882 = vmatpush2.msra.mxu0 %v413
    %883 = vmatprep.subr.mxu0 %v398
    %884 = vmatpush2.msra.mxu0 %v397
    %885 = vmatprep.subr.mxu0 %v382
    %886 = vmatpush2.msra.mxu0 %v381
    %887 = vmatprep.subr.mxu0 %v366
    %888 = vmatpush2.msra.mxu0 %v365
    %889 = vmatprep.subr.mxu0 %v350
    %890 = vmatpush2.msra.mxu0 %v349
    %891 = vmatprep.mubr.f32.mxu0 %v88
    %892 = vmatmul.mubr.f32.gmra.mxu0 %v87
    %v893 = vpop.f32.mrf.mxu0
    %v894 = vadd.f32 %v624, %v893
    %v895 = vpop.f32.mrf.mxu0
    %v896 = vadd.f32 %v628, %v895
    %897 = vdwg.mxu0
    %898 = vmatprep.subr.mxu0 %v336
    %899 = vmatpush1.msra.mxu0 %v335
    %900 = vmatprep.subr.mxu0 %v320
    %901 = vmatpush1.msra.mxu0 %v319
    %902 = vmatprep.subr.mxu0 %v304
    %903 = vmatpush1.msra.mxu0 %v303
    %904 = vmatprep.subr.mxu0 %v288
    %905 = vmatpush1.msra.mxu0 %v287
    %906 = vmatprep.subr.mxu0 %v272
    %907 = vmatpush1.msra.mxu0 %v271
    %908 = vmatprep.subr.mxu0 %v256
    %909 = vmatpush1.msra.mxu0 %v255
    %910 = vmatprep.subr.mxu0 %v240
    %911 = vmatpush1.msra.mxu0 %v239
    %912 = vmatprep.subr.mxu0 %v224
    %913 = vmatpush1.msra.mxu0 %v223
    %914 = vmatprep.subr.mxu0 %v208
    %915 = vmatpush1.msra.mxu0 %v207
    %916 = vmatprep.subr.mxu0 %v192
    %917 = vmatpush1.msra.mxu0 %v191
    %918 = vmatprep.subr.mxu0 %v176
    %919 = vmatpush1.msra.mxu0 %v175
    %920 = vmatprep.subr.mxu0 %v160
    %921 = vmatpush1.msra.mxu0 %v159
    %922 = vmatprep.subr.mxu0 %v144
    %923 = vmatpush1.msra.mxu0 %v143
    %924 = vmatprep.subr.mxu0 %v128
    %925 = vmatpush1.msra.mxu0 %v127
    %926 = vmatprep.subr.mxu0 %v112
    %927 = vmatpush1.msra.mxu0 %v111
    %928 = vmatprep.subr.mxu0 %v96
    %929 = vmatpush1.msra.mxu0 %v95
    %930 = vmatprep.subr.mxu0 %v592
    %931 = vmatpush2.msra.mxu0 %v591
    %932 = vmatprep.subr.mxu0 %v576
    %933 = vmatpush2.msra.mxu0 %v575
    %934 = vmatprep.subr.mxu0 %v560
    %935 = vmatpush2.msra.mxu0 %v559
    %936 = vmatprep.subr.mxu0 %v544
    %937 = vmatpush2.msra.mxu0 %v543
    %938 = vmatprep.subr.mxu0 %v528
    %939 = vmatpush2.msra.mxu0 %v527
    %940 = vmatprep.subr.mxu0 %v512
    %941 = vmatpush2.msra.mxu0 %v511
    %942 = vmatprep.subr.mxu0 %v496
    %943 = vmatpush2.msra.mxu0 %v495
    %944 = vmatprep.subr.mxu0 %v480
    %945 = vmatpush2.msra.mxu0 %v479
    %946 = vmatprep.subr.mxu0 %v464
    %947 = vmatpush2.msra.mxu0 %v463
    %948 = vmatprep.subr.mxu0 %v448
    %949 = vmatpush2.msra.mxu0 %v447
    %950 = vmatprep.subr.mxu0 %v432
    %951 = vmatpush2.msra.mxu0 %v431
    %952 = vmatprep.subr.mxu0 %v416
    %953 = vmatpush2.msra.mxu0 %v415
    %954 = vmatprep.subr.mxu0 %v400
    %955 = vmatpush2.msra.mxu0 %v399
    %956 = vmatprep.subr.mxu0 %v384
    %957 = vmatpush2.msra.mxu0 %v383
    %958 = vmatprep.subr.mxu0 %v368
    %959 = vmatpush2.msra.mxu0 %v367
    %960 = vmatprep.subr.mxu0 %v352
    %961 = vmatpush2.msra.mxu0 %v351
    %962 = vmatprep.mubr.f32.mxu0 %v88
    %963 = vmatmul.mubr.f32.gmra.mxu0 %v87
    %v964 = vpop.f32.mrf.mxu0
    %v965 = vadd.f32 %v632, %v964
    %v966 = vpop.f32.mrf.mxu0
    %v967 = vadd.f32 %v636, %v966
    %968 = vdwg.mxu0
    %969 = vmatprep.subr.mxu0 %v338
    %970 = vmatpush1.msra.mxu0 %v337
    %971 = vmatprep.subr.mxu0 %v322
    %972 = vmatpush1.msra.mxu0 %v321
    %973 = vmatprep.subr.mxu0 %v306
    %974 = vmatpush1.msra.mxu0 %v305
    %975 = vmatprep.subr.mxu0 %v290
    %976 = vmatpush1.msra.mxu0 %v289
    %977 = vmatprep.subr.mxu0 %v274
    %978 = vmatpush1.msra.mxu0 %v273
    %979 = vmatprep.subr.mxu0 %v258
    %980 = vmatpush1.msra.mxu0 %v257
    %981 = vmatprep.subr.mxu0 %v242
    %982 = vmatpush1.msra.mxu0 %v241
    %983 = vmatprep.subr.mxu0 %v226
    %984 = vmatpush1.msra.mxu0 %v225
    %985 = vmatprep.subr.mxu0 %v210
    %986 = vmatpush1.msra.mxu0 %v209
    %987 = vmatprep.subr.mxu0 %v194
    %988 = vmatpush1.msra.mxu0 %v193
    %989 = vmatprep.subr.mxu0 %v178
    %990 = vmatpush1.msra.mxu0 %v177
    %991 = vmatprep.subr.mxu0 %v162
    %992 = vmatpush1.msra.mxu0 %v161
    %993 = vmatprep.subr.mxu0 %v146
    %994 = vmatpush1.msra.mxu0 %v145
    %995 = vmatprep.subr.mxu0 %v130
    %996 = vmatpush1.msra.mxu0 %v129
    %997 = vmatprep.subr.mxu0 %v114
    %998 = vmatpush1.msra.mxu0 %v113
    %999 = vmatprep.subr.mxu0 %v98
    %1000 = vmatpush1.msra.mxu0 %v97
    %1001 = vmatprep.subr.mxu0 %v594
    %1002 = vmatpush2.msra.mxu0 %v593
    %1003 = vmatprep.subr.mxu0 %v578
    %1004 = vmatpush2.msra.mxu0 %v577
    %1005 = vmatprep.subr.mxu0 %v562
    %1006 = vmatpush2.msra.mxu0 %v561
    %1007 = vmatprep.subr.mxu0 %v546
    %1008 = vmatpush2.msra.mxu0 %v545
    %1009 = vmatprep.subr.mxu0 %v530
    %1010 = vmatpush2.msra.mxu0 %v529
    %1011 = vmatprep.subr.mxu0 %v514
    %1012 = vmatpush2.msra.mxu0 %v513
    %1013 = vmatprep.subr.mxu0 %v498
    %1014 = vmatpush2.msra.mxu0 %v497
    %1015 = vmatprep.subr.mxu0 %v482
    %1016 = vmatpush2.msra.mxu0 %v481
    %1017 = vmatprep.subr.mxu0 %v466
    %1018 = vmatpush2.msra.mxu0 %v465
    %1019 = vmatprep.subr.mxu0 %v450
    %1020 = vmatpush2.msra.mxu0 %v449
    %1021 = vmatprep.subr.mxu0 %v434
    %1022 = vmatpush2.msra.mxu0 %v433
    %1023 = vmatprep.subr.mxu0 %v418
    %1024 = vmatpush2.msra.mxu0 %v417
    %1025 = vmatprep.subr.mxu0 %v402
    %1026 = vmatpush2.msra.mxu0 %v401
    %1027 = vmatprep.subr.mxu0 %v386
    %1028 = vmatpush2.msra.mxu0 %v385
    %1029 = vmatprep.subr.mxu0 %v370
    %1030 = vmatpush2.msra.mxu0 %v369
    %1031 = vmatprep.subr.mxu0 %v354
    %1032 = vmatpush2.msra.mxu0 %v353
    %1033 = vmatprep.mubr.f32.mxu0 %v88
    %1034 = vmatmul.mubr.f32.gmra.mxu0 %v87
    %v1035 = vpop.f32.mrf.mxu0
    %v1036 = vadd.f32 %v640, %v1035
    %v1037 = vpop.f32.mrf.mxu0
    %v1038 = vadd.f32 %v644, %v1037
    %1039 = vdwg.mxu0
    %1040 = vmatprep.subr.mxu0 %v340
    %1041 = vmatpush1.msra.mxu0 %v339
    %1042 = vmatprep.subr.mxu0 %v324
    %1043 = vmatpush1.msra.mxu0 %v323
    %1044 = vmatprep.subr.mxu0 %v308
    %1045 = vmatpush1.msra.mxu0 %v307
    %1046 = vmatprep.subr.mxu0 %v292
    %1047 = vmatpush1.msra.mxu0 %v291
    %1048 = vmatprep.subr.mxu0 %v276
    %1049 = vmatpush1.msra.mxu0 %v275
    %1050 = vmatprep.subr.mxu0 %v260
    %1051 = vmatpush1.msra.mxu0 %v259
    %1052 = vmatprep.subr.mxu0 %v244
    %1053 = vmatpush1.msra.mxu0 %v243
    %1054 = vmatprep.subr.mxu0 %v228
    %1055 = vmatpush1.msra.mxu0 %v227
    %1056 = vmatprep.subr.mxu0 %v212
    %1057 = vmatpush1.msra.mxu0 %v211
    %1058 = vmatprep.subr.mxu0 %v196
    %1059 = vmatpush1.msra.mxu0 %v195
    %1060 = vmatprep.subr.mxu0 %v180
    %1061 = vmatpush1.msra.mxu0 %v179
    %1062 = vmatprep.subr.mxu0 %v164
    %1063 = vmatpush1.msra.mxu0 %v163
    %1064 = vmatprep.subr.mxu0 %v148
    %1065 = vmatpush1.msra.mxu0 %v147
    %1066 = vmatprep.subr.mxu0 %v132
    %1067 = vmatpush1.msra.mxu0 %v131
    %1068 = vmatprep.subr.mxu0 %v116
    %1069 = vmatpush1.msra.mxu0 %v115
    %1070 = vmatprep.subr.mxu0 %v100
    %1071 = vmatpush1.msra.mxu0 %v99
    %1072 = vmatprep.subr.mxu0 %v596
    %1073 = vmatpush2.msra.mxu0 %v595
    %1074 = vmatprep.subr.mxu0 %v580
    %1075 = vmatpush2.msra.mxu0 %v579
    %1076 = vmatprep.subr.mxu0 %v564
    %1077 = vmatpush2.msra.mxu0 %v563
    %1078 = vmatprep.subr.mxu0 %v548
    %1079 = vmatpush2.msra.mxu0 %v547
    %1080 = vmatprep.subr.mxu0 %v532
    %1081 = vmatpush2.msra.mxu0 %v531
    %1082 = vmatprep.subr.mxu0 %v516
    %1083 = vmatpush2.msra.mxu0 %v515
    %1084 = vmatprep.subr.mxu0 %v500
    %1085 = vmatpush2.msra.mxu0 %v499
    %1086 = vmatprep.subr.mxu0 %v484
    %1087 = vmatpush2.msra.mxu0 %v483
    %1088 = vmatprep.subr.mxu0 %v468
    %1089 = vmatpush2.msra.mxu0 %v467
    %1090 = vmatprep.subr.mxu0 %v452
    %1091 = vmatpush2.msra.mxu0 %v451
    %1092 = vmatprep.subr.mxu0 %v436
    %1093 = vmatpush2.msra.mxu0 %v435
    %1094 = vmatprep.subr.mxu0 %v420
    %1095 = vmatpush2.msra.mxu0 %v419
    %1096 = vmatprep.subr.mxu0 %v404
    %1097 = vmatpush2.msra.mxu0 %v403
    %1098 = vmatprep.subr.mxu0 %v388
    %1099 = vmatpush2.msra.mxu0 %v387
    %1100 = vmatprep.subr.mxu0 %v372
    %1101 = vmatpush2.msra.mxu0 %v371
    %1102 = vmatprep.subr.mxu0 %v356
    %1103 = vmatpush2.msra.mxu0 %v355
    %1104 = vmatprep.mubr.f32.mxu0 %v88
    %1105 = vmatmul.mubr.f32.gmra.mxu0 %v87
    %v1106 = vpop.f32.mrf.mxu0
    %v1107 = vadd.f32 %v648, %v1106
    %v1108 = vpop.f32.mrf.mxu0
    %v1109 = vadd.f32 %v652, %v1108
    %1110 = vdwg.mxu0
    %1111 = vmatprep.subr.mxu0 %v342
    %1112 = vmatpush1.msra.mxu0 %v341
    %1113 = vmatprep.subr.mxu0 %v326
    %1114 = vmatpush1.msra.mxu0 %v325
    %1115 = vmatprep.subr.mxu0 %v310
    %1116 = vmatpush1.msra.mxu0 %v309
    %1117 = vmatprep.subr.mxu0 %v294
    %1118 = vmatpush1.msra.mxu0 %v293
    %1119 = vmatprep.subr.mxu0 %v278
    %1120 = vmatpush1.msra.mxu0 %v277
    %1121 = vmatprep.subr.mxu0 %v262
    %1122 = vmatpush1.msra.mxu0 %v261
    %1123 = vmatprep.subr.mxu0 %v246
    %1124 = vmatpush1.msra.mxu0 %v245
    %1125 = vmatprep.subr.mxu0 %v230
    %1126 = vmatpush1.msra.mxu0 %v229
    %1127 = vmatprep.subr.mxu0 %v214
    %1128 = vmatpush1.msra.mxu0 %v213
    %1129 = vmatprep.subr.mxu0 %v198
    %1130 = vmatpush1.msra.mxu0 %v197
    %1131 = vmatprep.subr.mxu0 %v182
    %1132 = vmatpush1.msra.mxu0 %v181
    %1133 = vmatprep.subr.mxu0 %v166
    %1134 = vmatpush1.msra.mxu0 %v165
    %1135 = vmatprep.subr.mxu0 %v150
    %1136 = vmatpush1.msra.mxu0 %v149
    %1137 = vmatprep.subr.mxu0 %v134
    %1138 = vmatpush1.msra.mxu0 %v133
    %1139 = vmatprep.subr.mxu0 %v118
    %1140 = vmatpush1.msra.mxu0 %v117
    %1141 = vmatprep.subr.mxu0 %v102
    %1142 = vmatpush1.msra.mxu0 %v101
    %1143 = vmatprep.subr.mxu0 %v598
    %1144 = vmatpush2.msra.mxu0 %v597
    %1145 = vmatprep.subr.mxu0 %v582
    %1146 = vmatpush2.msra.mxu0 %v581
    %1147 = vmatprep.subr.mxu0 %v566
    %1148 = vmatpush2.msra.mxu0 %v565
    %1149 = vmatprep.subr.mxu0 %v550
    %1150 = vmatpush2.msra.mxu0 %v549
    %1151 = vmatprep.subr.mxu0 %v534
    %1152 = vmatpush2.msra.mxu0 %v533
    %1153 = vmatprep.subr.mxu0 %v518
    %1154 = vmatpush2.msra.mxu0 %v517
    %1155 = vmatprep.subr.mxu0 %v502
    %1156 = vmatpush2.msra.mxu0 %v501
    %1157 = vmatprep.subr.mxu0 %v486
    %1158 = vmatpush2.msra.mxu0 %v485
    %1159 = vmatprep.subr.mxu0 %v470
    %1160 = vmatpush2.msra.mxu0 %v469
    %1161 = vmatprep.subr.mxu0 %v454
    %1162 = vmatpush2.msra.mxu0 %v453
    %1163 = vmatprep.subr.mxu0 %v438
    %1164 = vmatpush2.msra.mxu0 %v437
    %1165 = vmatprep.subr.mxu0 %v422
    %1166 = vmatpush2.msra.mxu0 %v421
    %1167 = vmatprep.subr.mxu0 %v406
    %1168 = vmatpush2.msra.mxu0 %v405
    %1169 = vmatprep.subr.mxu0 %v390
    %1170 = vmatpush2.msra.mxu0 %v389
    %1171 = vmatprep.subr.mxu0 %v374
    %1172 = vmatpush2.msra.mxu0 %v373
    %1173 = vmatprep.subr.mxu0 %v358
    %1174 = vmatpush2.msra.mxu0 %v357
    %1175 = vmatprep.mubr.f32.mxu0 %v88
    %1176 = vmatmul.mubr.f32.gmra.mxu0 %v87
    %v1177 = vpop.f32.mrf.mxu0
    %v1178 = vadd.f32 %v656, %v1177
    %v1179 = vpop.f32.mrf.mxu0
    %v1180 = vadd.f32 %v660, %v1179
    %1181 = vdwg.mxu0
    %1182 = vmatprep.subr.mxu0 %v344
    %1183 = vmatpush1.msra.mxu0 %v343
    %1184 = vmatprep.subr.mxu0 %v328
    %1185 = vmatpush1.msra.mxu0 %v327
    %1186 = vmatprep.subr.mxu0 %v312
    %1187 = vmatpush1.msra.mxu0 %v311
    %1188 = vmatprep.subr.mxu0 %v296
    %1189 = vmatpush1.msra.mxu0 %v295
    %1190 = vmatprep.subr.mxu0 %v280
    %1191 = vmatpush1.msra.mxu0 %v279
    %1192 = vmatprep.subr.mxu0 %v264
    %1193 = vmatpush1.msra.mxu0 %v263
    %1194 = vmatprep.subr.mxu0 %v248
    %1195 = vmatpush1.msra.mxu0 %v247
    %1196 = vmatprep.subr.mxu0 %v232
    %1197 = vmatpush1.msra.mxu0 %v231
    %1198 = vmatprep.subr.mxu0 %v216
    %1199 = vmatpush1.msra.mxu0 %v215
    %1200 = vmatprep.subr.mxu0 %v200
    %1201 = vmatpush1.msra.mxu0 %v199
    %1202 = vmatprep.subr.mxu0 %v184
    %1203 = vmatpush1.msra.mxu0 %v183
    %1204 = vmatprep.subr.mxu0 %v168
    %1205 = vmatpush1.msra.mxu0 %v167
    %1206 = vmatprep.subr.mxu0 %v152
    %1207 = vmatpush1.msra.mxu0 %v151
    %1208 = vmatprep.subr.mxu0 %v136
    %1209 = vmatpush1.msra.mxu0 %v135
    %1210 = vmatprep.subr.mxu0 %v120
    %1211 = vmatpush1.msra.mxu0 %v119
    %1212 = vmatprep.subr.mxu0 %v104
    %1213 = vmatpush1.msra.mxu0 %v103
    %1214 = vmatprep.subr.mxu0 %v600
    %1215 = vmatpush2.msra.mxu0 %v599
    %1216 = vmatprep.subr.mxu0 %v584
    %1217 = vmatpush2.msra.mxu0 %v583
    %1218 = vmatprep.subr.mxu0 %v568
    %1219 = vmatpush2.msra.mxu0 %v567
    %1220 = vmatprep.subr.mxu0 %v552
    %1221 = vmatpush2.msra.mxu0 %v551
    %1222 = vmatprep.subr.mxu0 %v536
    %1223 = vmatpush2.msra.mxu0 %v535
    %1224 = vmatprep.subr.mxu0 %v520
    %1225 = vmatpush2.msra.mxu0 %v519
    %1226 = vmatprep.subr.mxu0 %v504
    %1227 = vmatpush2.msra.mxu0 %v503
    %1228 = vmatprep.subr.mxu0 %v488
    %1229 = vmatpush2.msra.mxu0 %v487
    %1230 = vmatprep.subr.mxu0 %v472
    %1231 = vmatpush2.msra.mxu0 %v471
    %1232 = vmatprep.subr.mxu0 %v456
    %1233 = vmatpush2.msra.mxu0 %v455
    %1234 = vmatprep.subr.mxu0 %v440
    %1235 = vmatpush2.msra.mxu0 %v439
    %1236 = vmatprep.subr.mxu0 %v424
    %1237 = vmatpush2.msra.mxu0 %v423
    %1238 = vmatprep.subr.mxu0 %v408
    %1239 = vmatpush2.msra.mxu0 %v407
    %1240 = vmatprep.subr.mxu0 %v392
    %1241 = vmatpush2.msra.mxu0 %v391
    %1242 = vmatprep.subr.mxu0 %v376
    %1243 = vmatpush2.msra.mxu0 %v375
    %1244 = vmatprep.subr.mxu0 %v360
    %1245 = vmatpush2.msra.mxu0 %v359
    %1246 = vmatprep.mubr.f32.mxu0 %v88
    %1247 = vmatmul.mubr.f32.gmra.mxu0 %v87
    %v1248 = vpop.f32.mrf.mxu0
    %v1249 = vadd.f32 %v664, %v1248
    %v1250 = vpop.f32.mrf.mxu0
    %v1251 = vadd.f32 %v668, %v1250
    %1252 = vdwg.mxu0
    %v1253 = vtanh.pop %v752
    %v1254 = vtanh.pop %v754
    %v1255 = vtanh.pop %v823
    %v1256 = vtanh.pop %v825
    %v1257 = vtanh.pop %v894
    %v1258 = vtanh.pop %v896
    %v1259 = vtanh.pop %v965
    %v1260 = vtanh.pop %v967
    %v1261 = vtanh.pop %v1036
    %v1262 = vtanh.pop %v1038
    %v1263 = vtanh.pop %v1107
    %v1264 = vtanh.pop %v1109
    %v1265 = vtanh.pop %v1178
    %v1266 = vtanh.pop %v1180
    %v1267 = vtanh.pop %v1249
    %v1268 = vtanh.pop %v1251
    %v1269 = vtanh.pop %v1253
    %v1270 = vtanh.pop %v1254
    %v1271 = vtanh.pop %v1255
    %v1272 = vtanh.pop %v1256
    %v1273 = vtanh.pop %v1257
    %v1274 = vtanh.pop %v1258
    %v1275 = vtanh.pop %v1259
    %v1276 = vtanh.pop %v1260
    %v1277 = vtanh.pop %v1261
    %v1278 = vtanh.pop %v1262
    %v1279 = vtanh.pop %v1263
    %v1280 = vtanh.pop %v1264
    %v1281 = vtanh.pop %v1265
    %v1282 = vtanh.pop %v1266
    %v1283 = vtanh.pop %v1267
    %v1284 = vtanh.pop %v1268
    %v1285 = vld [vmem:[#allocation6] sm:$0xff]
    %v1286 = vld [vmem:[#allocation6 + $0x8] sm:$0xff]
    %v1287 = vld [vmem:[#allocation6 + $0x10] sm:$0xff]
    %v1288 = vld [vmem:[#allocation6 + $0x18] sm:$0xff]
    %v1289 = vld [vmem:[#allocation6 + $0x20] sm:$0xff]
    %v1290 = vld [vmem:[#allocation6 + $0x28] sm:$0xff]
    %v1291 = vld [vmem:[#allocation6 + $0x30] sm:$0xff]
    %v1292 = vld [vmem:[#allocation6 + $0x38] sm:$0xff]
    %v1293 = vld [vmem:[#allocation6 + $0x40] sm:$0xff]
    %v1294 = vld [vmem:[#allocation6 + $0x48] sm:$0xff]
    %v1295 = vld [vmem:[#allocation6 + $0x50] sm:$0xff]
    %v1296 = vld [vmem:[#allocation6 + $0x58] sm:$0xff]
    %v1297 = vld [vmem:[#allocation6 + $0x60] sm:$0xff]
    %v1298 = vld [vmem:[#allocation6 + $0x68] sm:$0xff]
    %v1299 = vld [vmem:[#allocation6 + $0x70] sm:$0xff]
    %v1300 = vld [vmem:[#allocation6 + $0x78] sm:$0xff]
    %v1301 = vld [vmem:[#allocation6 + $0x80] sm:$0xff]
    %v1302 = vld [vmem:[#allocation6 + $0x88] sm:$0xff]
    %v1303 = vld [vmem:[#allocation6 + $0x90] sm:$0xff]
    %v1304 = vld [vmem:[#allocation6 + $0x98] sm:$0xff]
    %v1305 = vld [vmem:[#allocation6 + $0xa0] sm:$0xff]
    %v1306 = vld [vmem:[#allocation6 + $0xa8] sm:$0xff]
    %v1307 = vld [vmem:[#allocation6 + $0xb0] sm:$0xff]
    %v1308 = vld [vmem:[#allocation6 + $0xb8] sm:$0xff]
    %v1309 = vld [vmem:[#allocation6 + $0xc0] sm:$0xff]
    %v1310 = vld [vmem:[#allocation6 + $0xc8] sm:$0xff]
    %v1311 = vld [vmem:[#allocation6 + $0xd0] sm:$0xff]
    %v1312 = vld [vmem:[#allocation6 + $0xd8] sm:$0xff]
    %v1313 = vld [vmem:[#allocation6 + $0xe0] sm:$0xff]
    %v1314 = vld [vmem:[#allocation6 + $0xe8] sm:$0xff]
    %v1315 = vld [vmem:[#allocation6 + $0xf0] sm:$0xff]
    %v1316 = vld [vmem:[#allocation6 + $0xf8] sm:$0xff]
    %v1317 = vld [vmem:[#allocation6 + $0x100] sm:$0xff]
    %v1318 = vld [vmem:[#allocation6 + $0x108] sm:$0xff]
    %v1319 = vld [vmem:[#allocation6 + $0x110] sm:$0xff]
    %v1320 = vld [vmem:[#allocation6 + $0x118] sm:$0xff]
    %v1321 = vld [vmem:[#allocation6 + $0x120] sm:$0xff]
    %v1322 = vld [vmem:[#allocation6 + $0x128] sm:$0xff]
    %v1323 = vld [vmem:[#allocation6 + $0x130] sm:$0xff]
    %v1324 = vld [vmem:[#allocation6 + $0x138] sm:$0xff]
    %v1325 = vld [vmem:[#allocation6 + $0x140] sm:$0xff]
    %v1326 = vld [vmem:[#allocation6 + $0x148] sm:$0xff]
    %v1327 = vld [vmem:[#allocation6 + $0x150] sm:$0xff]
    %v1328 = vld [vmem:[#allocation6 + $0x158] sm:$0xff]
    %v1329 = vld [vmem:[#allocation6 + $0x160] sm:$0xff]
    %v1330 = vld [vmem:[#allocation6 + $0x168] sm:$0xff]
    %v1331 = vld [vmem:[#allocation6 + $0x170] sm:$0xff]
    %v1332 = vld [vmem:[#allocation6 + $0x178] sm:$0xff]
    %v1333 = vld [vmem:[#allocation6 + $0x180] sm:$0xff]
    %v1334 = vld [vmem:[#allocation6 + $0x188] sm:$0xff]
    %v1335 = vld [vmem:[#allocation6 + $0x190] sm:$0xff]
    %v1336 = vld [vmem:[#allocation6 + $0x198] sm:$0xff]
    %v1337 = vld [vmem:[#allocation6 + $0x1a0] sm:$0xff]
    %v1338 = vld [vmem:[#allocation6 + $0x1a8] sm:$0xff]
    %v1339 = vld [vmem:[#allocation6 + $0x1b0] sm:$0xff]
    %v1340 = vld [vmem:[#allocation6 + $0x1b8] sm:$0xff]
    %v1341 = vld [vmem:[#allocation6 + $0x1c0] sm:$0xff]
    %v1342 = vld [vmem:[#allocation6 + $0x1c8] sm:$0xff]
    %v1343 = vld [vmem:[#allocation6 + $0x1d0] sm:$0xff]
    %v1344 = vld [vmem:[#allocation6 + $0x1d8] sm:$0xff]
    %v1345 = vld [vmem:[#allocation6 + $0x1e0] sm:$0xff]
    %v1346 = vld [vmem:[#allocation6 + $0x1e8] sm:$0xff]
    %v1347 = vld [vmem:[#allocation6 + $0x1f0] sm:$0xff]
    %v1348 = vld [vmem:[#allocation6 + $0x1f8] sm:$0xff]
    %v1349 = vld [vmem:[#allocation6 + $0x200] sm:$0xff]
    %v1350 = vld [vmem:[#allocation6 + $0x208] sm:$0xff]
    %v1351 = vld [vmem:[#allocation6 + $0x210] sm:$0xff]
    %v1352 = vld [vmem:[#allocation6 + $0x218] sm:$0xff]
    %v1353 = vld [vmem:[#allocation6 + $0x220] sm:$0xff]
    %v1354 = vld [vmem:[#allocation6 + $0x228] sm:$0xff]
    %v1355 = vld [vmem:[#allocation6 + $0x230] sm:$0xff]
    %v1356 = vld [vmem:[#allocation6 + $0x238] sm:$0xff]
    %v1357 = vld [vmem:[#allocation6 + $0x240] sm:$0xff]
    %v1358 = vld [vmem:[#allocation6 + $0x248] sm:$0xff]
    %v1359 = vld [vmem:[#allocation6 + $0x250] sm:$0xff]
    %v1360 = vld [vmem:[#allocation6 + $0x258] sm:$0xff]
    %v1361 = vld [vmem:[#allocation6 + $0x260] sm:$0xff]
    %v1362 = vld [vmem:[#allocation6 + $0x268] sm:$0xff]
    %v1363 = vld [vmem:[#allocation6 + $0x270] sm:$0xff]
    %v1364 = vld [vmem:[#allocation6 + $0x278] sm:$0xff]
    %v1365 = vld [vmem:[#allocation6 + $0x280] sm:$0xff]
    %v1366 = vld [vmem:[#allocation6 + $0x288] sm:$0xff]
    %v1367 = vld [vmem:[#allocation6 + $0x290] sm:$0xff]
    %v1368 = vld [vmem:[#allocation6 + $0x298] sm:$0xff]
    %v1369 = vld [vmem:[#allocation6 + $0x2a0] sm:$0xff]
    %v1370 = vld [vmem:[#allocation6 + $0x2a8] sm:$0xff]
    %v1371 = vld [vmem:[#allocation6 + $0x2b0] sm:$0xff]
    %v1372 = vld [vmem:[#allocation6 + $0x2b8] sm:$0xff]
    %v1373 = vld [vmem:[#allocation6 + $0x2c0] sm:$0xff]
    %v1374 = vld [vmem:[#allocation6 + $0x2c8] sm:$0xff]
    %v1375 = vld [vmem:[#allocation6 + $0x2d0] sm:$0xff]
    %v1376 = vld [vmem:[#allocation6 + $0x2d8] sm:$0xff]
    %v1377 = vld [vmem:[#allocation6 + $0x2e0] sm:$0xff]
    %v1378 = vld [vmem:[#allocation6 + $0x2e8] sm:$0xff]
    %v1379 = vld [vmem:[#allocation6 + $0x2f0] sm:$0xff]
    %v1380 = vld [vmem:[#allocation6 + $0x2f8] sm:$0xff]
    %v1381 = vld [vmem:[#allocation6 + $0x300] sm:$0xff]
    %v1382 = vld [vmem:[#allocation6 + $0x308] sm:$0xff]
    %v1383 = vld [vmem:[#allocation6 + $0x310] sm:$0xff]
    %v1384 = vld [vmem:[#allocation6 + $0x318] sm:$0xff]
    %v1385 = vld [vmem:[#allocation6 + $0x320] sm:$0xff]
    %v1386 = vld [vmem:[#allocation6 + $0x328] sm:$0xff]
    %v1387 = vld [vmem:[#allocation6 + $0x330] sm:$0xff]
    %v1388 = vld [vmem:[#allocation6 + $0x338] sm:$0xff]
    %v1389 = vld [vmem:[#allocation6 + $0x340] sm:$0xff]
    %v1390 = vld [vmem:[#allocation6 + $0x348] sm:$0xff]
    %v1391 = vld [vmem:[#allocation6 + $0x350] sm:$0xff]
    %v1392 = vld [vmem:[#allocation6 + $0x358] sm:$0xff]
    %v1393 = vld [vmem:[#allocation6 + $0x360] sm:$0xff]
    %v1394 = vld [vmem:[#allocation6 + $0x368] sm:$0xff]
    %v1395 = vld [vmem:[#allocation6 + $0x370] sm:$0xff]
    %v1396 = vld [vmem:[#allocation6 + $0x378] sm:$0xff]
    %v1397 = vld [vmem:[#allocation6 + $0x380] sm:$0xff]
    %v1398 = vld [vmem:[#allocation6 + $0x388] sm:$0xff]
    %v1399 = vld [vmem:[#allocation6 + $0x390] sm:$0xff]
    %v1400 = vld [vmem:[#allocation6 + $0x398] sm:$0xff]
    %v1401 = vld [vmem:[#allocation6 + $0x3a0] sm:$0xff]
    %v1402 = vld [vmem:[#allocation6 + $0x3a8] sm:$0xff]
    %v1403 = vld [vmem:[#allocation6 + $0x3b0] sm:$0xff]
    %v1404 = vld [vmem:[#allocation6 + $0x3b8] sm:$0xff]
    %v1405 = vld [vmem:[#allocation6 + $0x3c0] sm:$0xff]
    %v1406 = vld [vmem:[#allocation6 + $0x3c8] sm:$0xff]
    %v1407 = vld [vmem:[#allocation6 + $0x3d0] sm:$0xff]
    %v1408 = vld [vmem:[#allocation6 + $0x3d8] sm:$0xff]
    %v1409 = vld [vmem:[#allocation6 + $0x3e0] sm:$0xff]
    %v1410 = vld [vmem:[#allocation6 + $0x3e8] sm:$0xff]
    %v1411 = vld [vmem:[#allocation6 + $0x3f0] sm:$0xff]
    %v1412 = vld [vmem:[#allocation6 + $0x3f8] sm:$0xff]
    %v1413 = vld [vmem:[#allocation6 + $0x400] sm:$0xff]
    %v1414 = vld [vmem:[#allocation6 + $0x408] sm:$0xff]
    %v1415 = vld [vmem:[#allocation6 + $0x410] sm:$0xff]
    %v1416 = vld [vmem:[#allocation6 + $0x418] sm:$0xff]
    %v1417 = vld [vmem:[#allocation6 + $0x420] sm:$0xff]
    %v1418 = vld [vmem:[#allocation6 + $0x428] sm:$0xff]
    %v1419 = vld [vmem:[#allocation6 + $0x430] sm:$0xff]
    %v1420 = vld [vmem:[#allocation6 + $0x438] sm:$0xff]
    %v1421 = vld [vmem:[#allocation6 + $0x440] sm:$0xff]
    %v1422 = vld [vmem:[#allocation6 + $0x448] sm:$0xff]
    %v1423 = vld [vmem:[#allocation6 + $0x450] sm:$0xff]
    %v1424 = vld [vmem:[#allocation6 + $0x458] sm:$0xff]
    %v1425 = vld [vmem:[#allocation6 + $0x460] sm:$0xff]
    %v1426 = vld [vmem:[#allocation6 + $0x468] sm:$0xff]
    %v1427 = vld [vmem:[#allocation6 + $0x470] sm:$0xff]
    %v1428 = vld [vmem:[#allocation6 + $0x478] sm:$0xff]
    %v1429 = vld [vmem:[#allocation6 + $0x480] sm:$0xff]
    %v1430 = vld [vmem:[#allocation6 + $0x488] sm:$0xff]
    %v1431 = vld [vmem:[#allocation6 + $0x490] sm:$0xff]
    %v1432 = vld [vmem:[#allocation6 + $0x498] sm:$0xff]
    %v1433 = vld [vmem:[#allocation6 + $0x4a0] sm:$0xff]
    %v1434 = vld [vmem:[#allocation6 + $0x4a8] sm:$0xff]
    %v1435 = vld [vmem:[#allocation6 + $0x4b0] sm:$0xff]
    %v1436 = vld [vmem:[#allocation6 + $0x4b8] sm:$0xff]
    %v1437 = vld [vmem:[#allocation6 + $0x4c0] sm:$0xff]
    %v1438 = vld [vmem:[#allocation6 + $0x4c8] sm:$0xff]
    %v1439 = vld [vmem:[#allocation6 + $0x4d0] sm:$0xff]
    %v1440 = vld [vmem:[#allocation6 + $0x4d8] sm:$0xff]
    %v1441 = vld [vmem:[#allocation6 + $0x4e0] sm:$0xff]
    %v1442 = vld [vmem:[#allocation6 + $0x4e8] sm:$0xff]
    %v1443 = vld [vmem:[#allocation6 + $0x4f0] sm:$0xff]
    %v1444 = vld [vmem:[#allocation6 + $0x4f8] sm:$0xff]
    %v1445 = vld [vmem:[#allocation6 + $0x500] sm:$0xff]
    %v1446 = vld [vmem:[#allocation6 + $0x508] sm:$0xff]
    %v1447 = vld [vmem:[#allocation6 + $0x510] sm:$0xff]
    %v1448 = vld [vmem:[#allocation6 + $0x518] sm:$0xff]
    %v1449 = vld [vmem:[#allocation6 + $0x520] sm:$0xff]
    %v1450 = vld [vmem:[#allocation6 + $0x528] sm:$0xff]
    %v1451 = vld [vmem:[#allocation6 + $0x530] sm:$0xff]
    %v1452 = vld [vmem:[#allocation6 + $0x538] sm:$0xff]
    %v1453 = vld [vmem:[#allocation6 + $0x540] sm:$0xff]
    %v1454 = vld [vmem:[#allocation6 + $0x548] sm:$0xff]
    %v1455 = vld [vmem:[#allocation6 + $0x550] sm:$0xff]
    %v1456 = vld [vmem:[#allocation6 + $0x558] sm:$0xff]
    %v1457 = vld [vmem:[#allocation6 + $0x560] sm:$0xff]
    %v1458 = vld [vmem:[#allocation6 + $0x568] sm:$0xff]
    %v1459 = vld [vmem:[#allocation6 + $0x570] sm:$0xff]
    %v1460 = vld [vmem:[#allocation6 + $0x578] sm:$0xff]
    %v1461 = vld [vmem:[#allocation6 + $0x580] sm:$0xff]
    %v1462 = vld [vmem:[#allocation6 + $0x588] sm:$0xff]
    %v1463 = vld [vmem:[#allocation6 + $0x590] sm:$0xff]
    %v1464 = vld [vmem:[#allocation6 + $0x598] sm:$0xff]
    %v1465 = vld [vmem:[#allocation6 + $0x5a0] sm:$0xff]
    %v1466 = vld [vmem:[#allocation6 + $0x5a8] sm:$0xff]
    %v1467 = vld [vmem:[#allocation6 + $0x5b0] sm:$0xff]
    %v1468 = vld [vmem:[#allocation6 + $0x5b8] sm:$0xff]
    %v1469 = vld [vmem:[#allocation6 + $0x5c0] sm:$0xff]
    %v1470 = vld [vmem:[#allocation6 + $0x5c8] sm:$0xff]
    %v1471 = vld [vmem:[#allocation6 + $0x5d0] sm:$0xff]
    %v1472 = vld [vmem:[#allocation6 + $0x5d8] sm:$0xff]
    %v1473 = vld [vmem:[#allocation6 + $0x5e0] sm:$0xff]
    %v1474 = vld [vmem:[#allocation6 + $0x5e8] sm:$0xff]
    %v1475 = vld [vmem:[#allocation6 + $0x5f0] sm:$0xff]
    %v1476 = vld [vmem:[#allocation6 + $0x5f8] sm:$0xff]
    %v1477 = vld [vmem:[#allocation6 + $0x600] sm:$0xff]
    %v1478 = vld [vmem:[#allocation6 + $0x608] sm:$0xff]
    %v1479 = vld [vmem:[#allocation6 + $0x610] sm:$0xff]
    %v1480 = vld [vmem:[#allocation6 + $0x618] sm:$0xff]
    %v1481 = vld [vmem:[#allocation6 + $0x620] sm:$0xff]
    %v1482 = vld [vmem:[#allocation6 + $0x628] sm:$0xff]
    %v1483 = vld [vmem:[#allocation6 + $0x630] sm:$0xff]
    %v1484 = vld [vmem:[#allocation6 + $0x638] sm:$0xff]
    %v1485 = vld [vmem:[#allocation6 + $0x640] sm:$0xff]
    %v1486 = vld [vmem:[#allocation6 + $0x648] sm:$0xff]
    %v1487 = vld [vmem:[#allocation6 + $0x650] sm:$0xff]
    %v1488 = vld [vmem:[#allocation6 + $0x658] sm:$0xff]
    %v1489 = vld [vmem:[#allocation6 + $0x660] sm:$0xff]
    %v1490 = vld [vmem:[#allocation6 + $0x668] sm:$0xff]
    %v1491 = vld [vmem:[#allocation6 + $0x670] sm:$0xff]
    %v1492 = vld [vmem:[#allocation6 + $0x678] sm:$0xff]
    %v1493 = vld [vmem:[#allocation6 + $0x680] sm:$0xff]
    %v1494 = vld [vmem:[#allocation6 + $0x688] sm:$0xff]
    %v1495 = vld [vmem:[#allocation6 + $0x690] sm:$0xff]
    %v1496 = vld [vmem:[#allocation6 + $0x698] sm:$0xff]
    %v1497 = vld [vmem:[#allocation6 + $0x6a0] sm:$0xff]
    %v1498 = vld [vmem:[#allocation6 + $0x6a8] sm:$0xff]
    %v1499 = vld [vmem:[#allocation6 + $0x6b0] sm:$0xff]
    %v1500 = vld [vmem:[#allocation6 + $0x6b8] sm:$0xff]
    %v1501 = vld [vmem:[#allocation6 + $0x6c0] sm:$0xff]
    %v1502 = vld [vmem:[#allocation6 + $0x6c8] sm:$0xff]
    %v1503 = vld [vmem:[#allocation6 + $0x6d0] sm:$0xff]
    %v1504 = vld [vmem:[#allocation6 + $0x6d8] sm:$0xff]
    %v1505 = vld [vmem:[#allocation6 + $0x6e0] sm:$0xff]
    %v1506 = vld [vmem:[#allocation6 + $0x6e8] sm:$0xff]
    %v1507 = vld [vmem:[#allocation6 + $0x6f0] sm:$0xff]
    %v1508 = vld [vmem:[#allocation6 + $0x6f8] sm:$0xff]
    %v1509 = vld [vmem:[#allocation6 + $0x700] sm:$0xff]
    %v1510 = vld [vmem:[#allocation6 + $0x708] sm:$0xff]
    %v1511 = vld [vmem:[#allocation6 + $0x710] sm:$0xff]
    %v1512 = vld [vmem:[#allocation6 + $0x718] sm:$0xff]
    %v1513 = vld [vmem:[#allocation6 + $0x720] sm:$0xff]
    %v1514 = vld [vmem:[#allocation6 + $0x728] sm:$0xff]
    %v1515 = vld [vmem:[#allocation6 + $0x730] sm:$0xff]
    %v1516 = vld [vmem:[#allocation6 + $0x738] sm:$0xff]
    %v1517 = vld [vmem:[#allocation6 + $0x740] sm:$0xff]
    %v1518 = vld [vmem:[#allocation6 + $0x748] sm:$0xff]
    %v1519 = vld [vmem:[#allocation6 + $0x750] sm:$0xff]
    %v1520 = vld [vmem:[#allocation6 + $0x758] sm:$0xff]
    %v1521 = vld [vmem:[#allocation6 + $0x760] sm:$0xff]
    %v1522 = vld [vmem:[#allocation6 + $0x768] sm:$0xff]
    %v1523 = vld [vmem:[#allocation6 + $0x770] sm:$0xff]
    %v1524 = vld [vmem:[#allocation6 + $0x778] sm:$0xff]
    %v1525 = vld [vmem:[#allocation6 + $0x780] sm:$0xff]
    %v1526 = vld [vmem:[#allocation6 + $0x788] sm:$0xff]
    %v1527 = vld [vmem:[#allocation6 + $0x790] sm:$0xff]
    %v1528 = vld [vmem:[#allocation6 + $0x798] sm:$0xff]
    %v1529 = vld [vmem:[#allocation6 + $0x7a0] sm:$0xff]
    %v1530 = vld [vmem:[#allocation6 + $0x7a8] sm:$0xff]
    %v1531 = vld [vmem:[#allocation6 + $0x7b0] sm:$0xff]
    %v1532 = vld [vmem:[#allocation6 + $0x7b8] sm:$0xff]
    %v1533 = vld [vmem:[#allocation6 + $0x7c0] sm:$0xff]
    %v1534 = vld [vmem:[#allocation6 + $0x7c8] sm:$0xff]
    %v1535 = vld [vmem:[#allocation6 + $0x7d0] sm:$0xff]
    %v1536 = vld [vmem:[#allocation6 + $0x7d8] sm:$0xff]
    %v1537 = vld [vmem:[#allocation6 + $0x7e0] sm:$0xff]
    %v1538 = vld [vmem:[#allocation6 + $0x7e8] sm:$0xff]
    %v1539 = vld [vmem:[#allocation6 + $0x7f0] sm:$0xff]
    %v1540 = vld [vmem:[#allocation6 + $0x7f8] sm:$0xff]
    %v1541 = vld [vmem:[#allocation7] sm:$0x1]
    %v1543 = vlaneseq
    %v1544 = vshrl.u32 %v1543, 7
    %v1545 = vsub.s32 0, %v1544
    %v1546 = vrot.slane %v1541, %v1545
    %1548 = vmatprep.subr.mxu0 0.0
    %1549 = vmatpush1.msra.mxu0 %v1300
    %1550 = vmatprep.subr.mxu0 0.0
    %1551 = vmatpush1.msra.mxu0 %v1299
    %1552 = vmatprep.subr.mxu0 0.0
    %1553 = vmatpush1.msra.mxu0 %v1298
    %1554 = vmatprep.subr.mxu0 0.0
    %1555 = vmatpush1.msra.mxu0 %v1297
    %1556 = vmatprep.subr.mxu0 0.0
    %1557 = vmatpush1.msra.mxu0 %v1296
    %1558 = vmatprep.subr.mxu0 0.0
    %1559 = vmatpush1.msra.mxu0 %v1295
    %1560 = vmatprep.subr.mxu0 0.0
    %1561 = vmatpush1.msra.mxu0 %v1294
    %1562 = vmatprep.subr.mxu0 0.0
    %1563 = vmatpush1.msra.mxu0 %v1293
    %1564 = vmatprep.subr.mxu0 0.0
    %1565 = vmatpush1.msra.mxu0 %v1292
    %1566 = vmatprep.subr.mxu0 0.0
    %1567 = vmatpush1.msra.mxu0 %v1291
    %1568 = vmatprep.subr.mxu0 0.0
    %1569 = vmatpush1.msra.mxu0 %v1290
    %1570 = vmatprep.subr.mxu0 0.0
    %1571 = vmatpush1.msra.mxu0 %v1289
    %1572 = vmatprep.subr.mxu0 0.0
    %1573 = vmatpush1.msra.mxu0 %v1288
    %1574 = vmatprep.subr.mxu0 0.0
    %1575 = vmatpush1.msra.mxu0 %v1287
    %1576 = vmatprep.subr.mxu0 0.0
    %1577 = vmatpush1.msra.mxu0 %v1286
    %1578 = vmatprep.subr.mxu0 0.0
    %1579 = vmatpush1.msra.mxu0 %v1285
    %1580 = vmatprep.subr.mxu0 0.0
    %1581 = vmatpush2.msra.mxu0 %v1316
    %1582 = vmatprep.subr.mxu0 0.0
    %1583 = vmatpush2.msra.mxu0 %v1315
    %1584 = vmatprep.subr.mxu0 0.0
    %1585 = vmatpush2.msra.mxu0 %v1314
    %1586 = vmatprep.subr.mxu0 0.0
    %1587 = vmatpush2.msra.mxu0 %v1313
    %1588 = vmatprep.subr.mxu0 0.0
    %1589 = vmatpush2.msra.mxu0 %v1312
    %1590 = vmatprep.subr.mxu0 0.0
    %1591 = vmatpush2.msra.mxu0 %v1311
    %1592 = vmatprep.subr.mxu0 0.0
    %1593 = vmatpush2.msra.mxu0 %v1310
    %1594 = vmatprep.subr.mxu0 0.0
    %1595 = vmatpush2.msra.mxu0 %v1309
    %1596 = vmatprep.subr.mxu0 0.0
    %1597 = vmatpush2.msra.mxu0 %v1308
    %1598 = vmatprep.subr.mxu0 0.0
    %1599 = vmatpush2.msra.mxu0 %v1307
    %1600 = vmatprep.subr.mxu0 0.0
    %1601 = vmatpush2.msra.mxu0 %v1306
    %1602 = vmatprep.subr.mxu0 0.0
    %1603 = vmatpush2.msra.mxu0 %v1305
    %1604 = vmatprep.subr.mxu0 0.0
    %1605 = vmatpush2.msra.mxu0 %v1304
    %1606 = vmatprep.subr.mxu0 0.0
    %1607 = vmatpush2.msra.mxu0 %v1303
    %1608 = vmatprep.subr.mxu0 0.0
    %1609 = vmatpush2.msra.mxu0 %v1302
    %1610 = vmatprep.subr.mxu0 0.0
    %1611 = vmatpush2.msra.mxu0 %v1301
    %1612 = vmatprep.mubr.f32.mxu0 %v1270
    %1613 = vmatmul.mubr.f32.gmra.mxu0 %v1269
    %v1614 = vpop.f32.mrf.mxu0
    %v1615 = vadd.f32 %v1546, %v1614
    %v1616 = vpop.f32.mrf.mxu0
    %1617 = vdwg.mxu0
    %1618 = vmatprep.subr.mxu0 0.0
    %1619 = vmatpush1.msra.mxu0 %v1332
    %1620 = vmatprep.subr.mxu0 0.0
    %1621 = vmatpush1.msra.mxu0 %v1331
    %1622 = vmatprep.subr.mxu0 0.0
    %1623 = vmatpush1.msra.mxu0 %v1330
    %1624 = vmatprep.subr.mxu0 0.0
    %1625 = vmatpush1.msra.mxu0 %v1329
    %1626 = vmatprep.subr.mxu0 0.0
    %1627 = vmatpush1.msra.mxu0 %v1328
    %1628 = vmatprep.subr.mxu0 0.0
    %1629 = vmatpush1.msra.mxu0 %v1327
    %1630 = vmatprep.subr.mxu0 0.0
    %1631 = vmatpush1.msra.mxu0 %v1326
    %1632 = vmatprep.subr.mxu0 0.0
    %1633 = vmatpush1.msra.mxu0 %v1325
    %1634 = vmatprep.subr.mxu0 0.0
    %1635 = vmatpush1.msra.mxu0 %v1324
    %1636 = vmatprep.subr.mxu0 0.0
    %1637 = vmatpush1.msra.mxu0 %v1323
    %1638 = vmatprep.subr.mxu0 0.0
    %1639 = vmatpush1.msra.mxu0 %v1322
    %1640 = vmatprep.subr.mxu0 0.0
    %1641 = vmatpush1.msra.mxu0 %v1321
    %1642 = vmatprep.subr.mxu0 0.0
    %1643 = vmatpush1.msra.mxu0 %v1320
    %1644 = vmatprep.subr.mxu0 0.0
    %1645 = vmatpush1.msra.mxu0 %v1319
    %1646 = vmatprep.subr.mxu0 0.0
    %1647 = vmatpush1.msra.mxu0 %v1318
    %1648 = vmatprep.subr.mxu0 0.0
    %1649 = vmatpush1.msra.mxu0 %v1317
    %1650 = vmatprep.subr.mxu0 0.0
    %1651 = vmatpush2.msra.mxu0 %v1348
    %1652 = vmatprep.subr.mxu0 0.0
    %1653 = vmatpush2.msra.mxu0 %v1347
    %1654 = vmatprep.subr.mxu0 0.0
    %1655 = vmatpush2.msra.mxu0 %v1346
    %1656 = vmatprep.subr.mxu0 0.0
    %1657 = vmatpush2.msra.mxu0 %v1345
    %1658 = vmatprep.subr.mxu0 0.0
    %1659 = vmatpush2.msra.mxu0 %v1344
    %1660 = vmatprep.subr.mxu0 0.0
    %1661 = vmatpush2.msra.mxu0 %v1343
    %1662 = vmatprep.subr.mxu0 0.0
    %1663 = vmatpush2.msra.mxu0 %v1342
    %1664 = vmatprep.subr.mxu0 0.0
    %1665 = vmatpush2.msra.mxu0 %v1341
    %1666 = vmatprep.subr.mxu0 0.0
    %1667 = vmatpush2.msra.mxu0 %v1340
    %1668 = vmatprep.subr.mxu0 0.0
    %1669 = vmatpush2.msra.mxu0 %v1339
    %1670 = vmatprep.subr.mxu0 0.0
    %1671 = vmatpush2.msra.mxu0 %v1338
    %1672 = vmatprep.subr.mxu0 0.0
    %1673 = vmatpush2.msra.mxu0 %v1337
    %1674 = vmatprep.subr.mxu0 0.0
    %1675 = vmatpush2.msra.mxu0 %v1336
    %1676 = vmatprep.subr.mxu0 0.0
    %1677 = vmatpush2.msra.mxu0 %v1335
    %1678 = vmatprep.subr.mxu0 0.0
    %1679 = vmatpush2.msra.mxu0 %v1334
    %1680 = vmatprep.subr.mxu0 0.0
    %1681 = vmatpush2.msra.mxu0 %v1333
    %1682 = vmatprep.mubr.f32.mxu0 %v1272
    %1683 = vmatmul.mubr.f32.gmra.mxu0 %v1271
    %v1684 = vpop.f32.mrf.mxu0
    %v1685 = vadd.f32 %v1615, %v1684
    %v1686 = vpop.f32.mrf.mxu0
    %1687 = vdwg.mxu0
    %1688 = vmatprep.subr.mxu0 0.0
    %1689 = vmatpush1.msra.mxu0 %v1364
    %1690 = vmatprep.subr.mxu0 0.0
    %1691 = vmatpush1.msra.mxu0 %v1363
    %1692 = vmatprep.subr.mxu0 0.0
    %1693 = vmatpush1.msra.mxu0 %v1362
    %1694 = vmatprep.subr.mxu0 0.0
    %1695 = vmatpush1.msra.mxu0 %v1361
    %1696 = vmatprep.subr.mxu0 0.0
    %1697 = vmatpush1.msra.mxu0 %v1360
    %1698 = vmatprep.subr.mxu0 0.0
    %1699 = vmatpush1.msra.mxu0 %v1359
    %1700 = vmatprep.subr.mxu0 0.0
    %1701 = vmatpush1.msra.mxu0 %v1358
    %1702 = vmatprep.subr.mxu0 0.0
    %1703 = vmatpush1.msra.mxu0 %v1357
    %1704 = vmatprep.subr.mxu0 0.0
    %1705 = vmatpush1.msra.mxu0 %v1356
    %1706 = vmatprep.subr.mxu0 0.0
    %1707 = vmatpush1.msra.mxu0 %v1355
    %1708 = vmatprep.subr.mxu0 0.0
    %1709 = vmatpush1.msra.mxu0 %v1354
    %1710 = vmatprep.subr.mxu0 0.0
    %1711 = vmatpush1.msra.mxu0 %v1353
    %1712 = vmatprep.subr.mxu0 0.0
    %1713 = vmatpush1.msra.mxu0 %v1352
    %1714 = vmatprep.subr.mxu0 0.0
    %1715 = vmatpush1.msra.mxu0 %v1351
    %1716 = vmatprep.subr.mxu0 0.0
    %1717 = vmatpush1.msra.mxu0 %v1350
    %1718 = vmatprep.subr.mxu0 0.0
    %1719 = vmatpush1.msra.mxu0 %v1349
    %1720 = vmatprep.subr.mxu0 0.0
    %1721 = vmatpush2.msra.mxu0 %v1380
    %1722 = vmatprep.subr.mxu0 0.0
    %1723 = vmatpush2.msra.mxu0 %v1379
    %1724 = vmatprep.subr.mxu0 0.0
    %1725 = vmatpush2.msra.mxu0 %v1378
    %1726 = vmatprep.subr.mxu0 0.0
    %1727 = vmatpush2.msra.mxu0 %v1377
    %1728 = vmatprep.subr.mxu0 0.0
    %1729 = vmatpush2.msra.mxu0 %v1376
    %1730 = vmatprep.subr.mxu0 0.0
    %1731 = vmatpush2.msra.mxu0 %v1375
    %1732 = vmatprep.subr.mxu0 0.0
    %1733 = vmatpush2.msra.mxu0 %v1374
    %1734 = vmatprep.subr.mxu0 0.0
    %1735 = vmatpush2.msra.mxu0 %v1373
    %1736 = vmatprep.subr.mxu0 0.0
    %1737 = vmatpush2.msra.mxu0 %v1372
    %1738 = vmatprep.subr.mxu0 0.0
    %1739 = vmatpush2.msra.mxu0 %v1371
    %1740 = vmatprep.subr.mxu0 0.0
    %1741 = vmatpush2.msra.mxu0 %v1370
    %1742 = vmatprep.subr.mxu0 0.0
    %1743 = vmatpush2.msra.mxu0 %v1369
    %1744 = vmatprep.subr.mxu0 0.0
    %1745 = vmatpush2.msra.mxu0 %v1368
    %1746 = vmatprep.subr.mxu0 0.0
    %1747 = vmatpush2.msra.mxu0 %v1367
    %1748 = vmatprep.subr.mxu0 0.0
    %1749 = vmatpush2.msra.mxu0 %v1366
    %1750 = vmatprep.subr.mxu0 0.0
    %1751 = vmatpush2.msra.mxu0 %v1365
    %1752 = vmatprep.mubr.f32.mxu0 %v1274
    %1753 = vmatmul.mubr.f32.gmra.mxu0 %v1273
    %v1754 = vpop.f32.mrf.mxu0
    %v1755 = vadd.f32 %v1685, %v1754
    %v1756 = vpop.f32.mrf.mxu0
    %1757 = vdwg.mxu0
    %1758 = vmatprep.subr.mxu0 0.0
    %1759 = vmatpush1.msra.mxu0 %v1396
    %1760 = vmatprep.subr.mxu0 0.0
    %1761 = vmatpush1.msra.mxu0 %v1395
    %1762 = vmatprep.subr.mxu0 0.0
    %1763 = vmatpush1.msra.mxu0 %v1394
    %1764 = vmatprep.subr.mxu0 0.0
    %1765 = vmatpush1.msra.mxu0 %v1393
    %1766 = vmatprep.subr.mxu0 0.0
    %1767 = vmatpush1.msra.mxu0 %v1392
    %1768 = vmatprep.subr.mxu0 0.0
    %1769 = vmatpush1.msra.mxu0 %v1391
    %1770 = vmatprep.subr.mxu0 0.0
    %1771 = vmatpush1.msra.mxu0 %v1390
    %1772 = vmatprep.subr.mxu0 0.0
    %1773 = vmatpush1.msra.mxu0 %v1389
    %1774 = vmatprep.subr.mxu0 0.0
    %1775 = vmatpush1.msra.mxu0 %v1388
    %1776 = vmatprep.subr.mxu0 0.0
    %1777 = vmatpush1.msra.mxu0 %v1387
    %1778 = vmatprep.subr.mxu0 0.0
    %1779 = vmatpush1.msra.mxu0 %v1386
    %1780 = vmatprep.subr.mxu0 0.0
    %1781 = vmatpush1.msra.mxu0 %v1385
    %1782 = vmatprep.subr.mxu0 0.0
    %1783 = vmatpush1.msra.mxu0 %v1384
    %1784 = vmatprep.subr.mxu0 0.0
    %1785 = vmatpush1.msra.mxu0 %v1383
    %1786 = vmatprep.subr.mxu0 0.0
    %1787 = vmatpush1.msra.mxu0 %v1382
    %1788 = vmatprep.subr.mxu0 0.0
    %1789 = vmatpush1.msra.mxu0 %v1381
    %1790 = vmatprep.subr.mxu0 0.0
    %1791 = vmatpush2.msra.mxu0 %v1412
    %1792 = vmatprep.subr.mxu0 0.0
    %1793 = vmatpush2.msra.mxu0 %v1411
    %1794 = vmatprep.subr.mxu0 0.0
    %1795 = vmatpush2.msra.mxu0 %v1410
    %1796 = vmatprep.subr.mxu0 0.0
    %1797 = vmatpush2.msra.mxu0 %v1409
    %1798 = vmatprep.subr.mxu0 0.0
    %1799 = vmatpush2.msra.mxu0 %v1408
    %1800 = vmatprep.subr.mxu0 0.0
    %1801 = vmatpush2.msra.mxu0 %v1407
    %1802 = vmatprep.subr.mxu0 0.0
    %1803 = vmatpush2.msra.mxu0 %v1406
    %1804 = vmatprep.subr.mxu0 0.0
    %1805 = vmatpush2.msra.mxu0 %v1405
    %1806 = vmatprep.subr.mxu0 0.0
    %1807 = vmatpush2.msra.mxu0 %v1404
    %1808 = vmatprep.subr.mxu0 0.0
    %1809 = vmatpush2.msra.mxu0 %v1403
    %1810 = vmatprep.subr.mxu0 0.0
    %1811 = vmatpush2.msra.mxu0 %v1402
    %1812 = vmatprep.subr.mxu0 0.0
    %1813 = vmatpush2.msra.mxu0 %v1401
    %1814 = vmatprep.subr.mxu0 0.0
    %1815 = vmatpush2.msra.mxu0 %v1400
    %1816 = vmatprep.subr.mxu0 0.0
    %1817 = vmatpush2.msra.mxu0 %v1399
    %1818 = vmatprep.subr.mxu0 0.0
    %1819 = vmatpush2.msra.mxu0 %v1398
    %1820 = vmatprep.subr.mxu0 0.0
    %1821 = vmatpush2.msra.mxu0 %v1397
    %1822 = vmatprep.mubr.f32.mxu0 %v1276
    %1823 = vmatmul.mubr.f32.gmra.mxu0 %v1275
    %v1824 = vpop.f32.mrf.mxu0
    %v1825 = vadd.f32 %v1755, %v1824
    %v1826 = vpop.f32.mrf.mxu0
    %1827 = vdwg.mxu0
    %1828 = vmatprep.subr.mxu0 0.0
    %1829 = vmatpush1.msra.mxu0 %v1428
    %1830 = vmatprep.subr.mxu0 0.0
    %1831 = vmatpush1.msra.mxu0 %v1427
    %1832 = vmatprep.subr.mxu0 0.0
    %1833 = vmatpush1.msra.mxu0 %v1426
    %1834 = vmatprep.subr.mxu0 0.0
    %1835 = vmatpush1.msra.mxu0 %v1425
    %1836 = vmatprep.subr.mxu0 0.0
    %1837 = vmatpush1.msra.mxu0 %v1424
    %1838 = vmatprep.subr.mxu0 0.0
    %1839 = vmatpush1.msra.mxu0 %v1423
    %1840 = vmatprep.subr.mxu0 0.0
    %1841 = vmatpush1.msra.mxu0 %v1422
    %1842 = vmatprep.subr.mxu0 0.0
    %1843 = vmatpush1.msra.mxu0 %v1421
    %1844 = vmatprep.subr.mxu0 0.0
    %1845 = vmatpush1.msra.mxu0 %v1420
    %1846 = vmatprep.subr.mxu0 0.0
    %1847 = vmatpush1.msra.mxu0 %v1419
    %1848 = vmatprep.subr.mxu0 0.0
    %1849 = vmatpush1.msra.mxu0 %v1418
    %1850 = vmatprep.subr.mxu0 0.0
    %1851 = vmatpush1.msra.mxu0 %v1417
    %1852 = vmatprep.subr.mxu0 0.0
    %1853 = vmatpush1.msra.mxu0 %v1416
    %1854 = vmatprep.subr.mxu0 0.0
    %1855 = vmatpush1.msra.mxu0 %v1415
    %1856 = vmatprep.subr.mxu0 0.0
    %1857 = vmatpush1.msra.mxu0 %v1414
    %1858 = vmatprep.subr.mxu0 0.0
    %1859 = vmatpush1.msra.mxu0 %v1413
    %1860 = vmatprep.subr.mxu0 0.0
    %1861 = vmatpush2.msra.mxu0 %v1444
    %1862 = vmatprep.subr.mxu0 0.0
    %1863 = vmatpush2.msra.mxu0 %v1443
    %1864 = vmatprep.subr.mxu0 0.0
    %1865 = vmatpush2.msra.mxu0 %v1442
    %1866 = vmatprep.subr.mxu0 0.0
    %1867 = vmatpush2.msra.mxu0 %v1441
    %1868 = vmatprep.subr.mxu0 0.0
    %1869 = vmatpush2.msra.mxu0 %v1440
    %1870 = vmatprep.subr.mxu0 0.0
    %1871 = vmatpush2.msra.mxu0 %v1439
    %1872 = vmatprep.subr.mxu0 0.0
    %1873 = vmatpush2.msra.mxu0 %v1438
    %1874 = vmatprep.subr.mxu0 0.0
    %1875 = vmatpush2.msra.mxu0 %v1437
    %1876 = vmatprep.subr.mxu0 0.0
    %1877 = vmatpush2.msra.mxu0 %v1436
    %1878 = vmatprep.subr.mxu0 0.0
    %1879 = vmatpush2.msra.mxu0 %v1435
    %1880 = vmatprep.subr.mxu0 0.0
    %1881 = vmatpush2.msra.mxu0 %v1434
    %1882 = vmatprep.subr.mxu0 0.0
    %1883 = vmatpush2.msra.mxu0 %v1433
    %1884 = vmatprep.subr.mxu0 0.0
    %1885 = vmatpush2.msra.mxu0 %v1432
    %1886 = vmatprep.subr.mxu0 0.0
    %1887 = vmatpush2.msra.mxu0 %v1431
    %1888 = vmatprep.subr.mxu0 0.0
    %1889 = vmatpush2.msra.mxu0 %v1430
    %1890 = vmatprep.subr.mxu0 0.0
    %1891 = vmatpush2.msra.mxu0 %v1429
    %1892 = vmatprep.mubr.f32.mxu0 %v1278
    %1893 = vmatmul.mubr.f32.gmra.mxu0 %v1277
    %v1894 = vpop.f32.mrf.mxu0
    %v1895 = vadd.f32 %v1825, %v1894
    %v1896 = vpop.f32.mrf.mxu0
    %1897 = vdwg.mxu0
    %1898 = vmatprep.subr.mxu0 0.0
    %1899 = vmatpush1.msra.mxu0 %v1460
    %1900 = vmatprep.subr.mxu0 0.0
    %1901 = vmatpush1.msra.mxu0 %v1459
    %1902 = vmatprep.subr.mxu0 0.0
    %1903 = vmatpush1.msra.mxu0 %v1458
    %1904 = vmatprep.subr.mxu0 0.0
    %1905 = vmatpush1.msra.mxu0 %v1457
    %1906 = vmatprep.subr.mxu0 0.0
    %1907 = vmatpush1.msra.mxu0 %v1456
    %1908 = vmatprep.subr.mxu0 0.0
    %1909 = vmatpush1.msra.mxu0 %v1455
    %1910 = vmatprep.subr.mxu0 0.0
    %1911 = vmatpush1.msra.mxu0 %v1454
    %1912 = vmatprep.subr.mxu0 0.0
    %1913 = vmatpush1.msra.mxu0 %v1453
    %1914 = vmatprep.subr.mxu0 0.0
    %1915 = vmatpush1.msra.mxu0 %v1452
    %1916 = vmatprep.subr.mxu0 0.0
    %1917 = vmatpush1.msra.mxu0 %v1451
    %1918 = vmatprep.subr.mxu0 0.0
    %1919 = vmatpush1.msra.mxu0 %v1450
    %1920 = vmatprep.subr.mxu0 0.0
    %1921 = vmatpush1.msra.mxu0 %v1449
    %1922 = vmatprep.subr.mxu0 0.0
    %1923 = vmatpush1.msra.mxu0 %v1448
    %1924 = vmatprep.subr.mxu0 0.0
    %1925 = vmatpush1.msra.mxu0 %v1447
    %1926 = vmatprep.subr.mxu0 0.0
    %1927 = vmatpush1.msra.mxu0 %v1446
    %1928 = vmatprep.subr.mxu0 0.0
    %1929 = vmatpush1.msra.mxu0 %v1445
    %1930 = vmatprep.subr.mxu0 0.0
    %1931 = vmatpush2.msra.mxu0 %v1476
    %1932 = vmatprep.subr.mxu0 0.0
    %1933 = vmatpush2.msra.mxu0 %v1475
    %1934 = vmatprep.subr.mxu0 0.0
    %1935 = vmatpush2.msra.mxu0 %v1474
    %1936 = vmatprep.subr.mxu0 0.0
    %1937 = vmatpush2.msra.mxu0 %v1473
    %1938 = vmatprep.subr.mxu0 0.0
    %1939 = vmatpush2.msra.mxu0 %v1472
    %1940 = vmatprep.subr.mxu0 0.0
    %1941 = vmatpush2.msra.mxu0 %v1471
    %1942 = vmatprep.subr.mxu0 0.0
    %1943 = vmatpush2.msra.mxu0 %v1470
    %1944 = vmatprep.subr.mxu0 0.0
    %1945 = vmatpush2.msra.mxu0 %v1469
    %1946 = vmatprep.subr.mxu0 0.0
    %1947 = vmatpush2.msra.mxu0 %v1468
    %1948 = vmatprep.subr.mxu0 0.0
    %1949 = vmatpush2.msra.mxu0 %v1467
    %1950 = vmatprep.subr.mxu0 0.0
    %1951 = vmatpush2.msra.mxu0 %v1466
    %1952 = vmatprep.subr.mxu0 0.0
    %1953 = vmatpush2.msra.mxu0 %v1465
    %1954 = vmatprep.subr.mxu0 0.0
    %1955 = vmatpush2.msra.mxu0 %v1464
    %1956 = vmatprep.subr.mxu0 0.0
    %1957 = vmatpush2.msra.mxu0 %v1463
    %1958 = vmatprep.subr.mxu0 0.0
    %1959 = vmatpush2.msra.mxu0 %v1462
    %1960 = vmatprep.subr.mxu0 0.0
    %1961 = vmatpush2.msra.mxu0 %v1461
    %1962 = vmatprep.mubr.f32.mxu0 %v1280
    %1963 = vmatmul.mubr.f32.gmra.mxu0 %v1279
    %v1964 = vpop.f32.mrf.mxu0
    %v1965 = vadd.f32 %v1895, %v1964
    %v1966 = vpop.f32.mrf.mxu0
    %1967 = vdwg.mxu0
    %1968 = vmatprep.subr.mxu0 0.0
    %1969 = vmatpush1.msra.mxu0 %v1492
    %1970 = vmatprep.subr.mxu0 0.0
    %1971 = vmatpush1.msra.mxu0 %v1491
    %1972 = vmatprep.subr.mxu0 0.0
    %1973 = vmatpush1.msra.mxu0 %v1490
    %1974 = vmatprep.subr.mxu0 0.0
    %1975 = vmatpush1.msra.mxu0 %v1489
    %1976 = vmatprep.subr.mxu0 0.0
    %1977 = vmatpush1.msra.mxu0 %v1488
    %1978 = vmatprep.subr.mxu0 0.0
    %1979 = vmatpush1.msra.mxu0 %v1487
    %1980 = vmatprep.subr.mxu0 0.0
    %1981 = vmatpush1.msra.mxu0 %v1486
    %1982 = vmatprep.subr.mxu0 0.0
    %1983 = vmatpush1.msra.mxu0 %v1485
    %1984 = vmatprep.subr.mxu0 0.0
    %1985 = vmatpush1.msra.mxu0 %v1484
    %1986 = vmatprep.subr.mxu0 0.0
    %1987 = vmatpush1.msra.mxu0 %v1483
    %1988 = vmatprep.subr.mxu0 0.0
    %1989 = vmatpush1.msra.mxu0 %v1482
    %1990 = vmatprep.subr.mxu0 0.0
    %1991 = vmatpush1.msra.mxu0 %v1481
    %1992 = vmatprep.subr.mxu0 0.0
    %1993 = vmatpush1.msra.mxu0 %v1480
    %1994 = vmatprep.subr.mxu0 0.0
    %1995 = vmatpush1.msra.mxu0 %v1479
    %1996 = vmatprep.subr.mxu0 0.0
    %1997 = vmatpush1.msra.mxu0 %v1478
    %1998 = vmatprep.subr.mxu0 0.0
    %1999 = vmatpush1.msra.mxu0 %v1477
    %2000 = vmatprep.subr.mxu0 0.0
    %2001 = vmatpush2.msra.mxu0 %v1508
    %2002 = vmatprep.subr.mxu0 0.0
    %2003 = vmatpush2.msra.mxu0 %v1507
    %2004 = vmatprep.subr.mxu0 0.0
    %2005 = vmatpush2.msra.mxu0 %v1506
    %2006 = vmatprep.subr.mxu0 0.0
    %2007 = vmatpush2.msra.mxu0 %v1505
    %2008 = vmatprep.subr.mxu0 0.0
    %2009 = vmatpush2.msra.mxu0 %v1504
    %2010 = vmatprep.subr.mxu0 0.0
    %2011 = vmatpush2.msra.mxu0 %v1503
    %2012 = vmatprep.subr.mxu0 0.0
    %2013 = vmatpush2.msra.mxu0 %v1502
    %2014 = vmatprep.subr.mxu0 0.0
    %2015 = vmatpush2.msra.mxu0 %v1501
    %2016 = vmatprep.subr.mxu0 0.0
    %2017 = vmatpush2.msra.mxu0 %v1500
    %2018 = vmatprep.subr.mxu0 0.0
    %2019 = vmatpush2.msra.mxu0 %v1499
    %2020 = vmatprep.subr.mxu0 0.0
    %2021 = vmatpush2.msra.mxu0 %v1498
    %2022 = vmatprep.subr.mxu0 0.0
    %2023 = vmatpush2.msra.mxu0 %v1497
    %2024 = vmatprep.subr.mxu0 0.0
    %2025 = vmatpush2.msra.mxu0 %v1496
    %2026 = vmatprep.subr.mxu0 0.0
    %2027 = vmatpush2.msra.mxu0 %v1495
    %2028 = vmatprep.subr.mxu0 0.0
    %2029 = vmatpush2.msra.mxu0 %v1494
    %2030 = vmatprep.subr.mxu0 0.0
    %2031 = vmatpush2.msra.mxu0 %v1493
    %2032 = vmatprep.mubr.f32.mxu0 %v1282
    %2033 = vmatmul.mubr.f32.gmra.mxu0 %v1281
    %v2034 = vpop.f32.mrf.mxu0
    %v2035 = vadd.f32 %v1965, %v2034
    %v2036 = vpop.f32.mrf.mxu0
    %2037 = vdwg.mxu0
    %2038 = vmatprep.subr.mxu0 0.0
    %2039 = vmatpush1.msra.mxu0 %v1524
    %2040 = vmatprep.subr.mxu0 0.0
    %2041 = vmatpush1.msra.mxu0 %v1523
    %2042 = vmatprep.subr.mxu0 0.0
    %2043 = vmatpush1.msra.mxu0 %v1522
    %2044 = vmatprep.subr.mxu0 0.0
    %2045 = vmatpush1.msra.mxu0 %v1521
    %2046 = vmatprep.subr.mxu0 0.0
    %2047 = vmatpush1.msra.mxu0 %v1520
    %2048 = vmatprep.subr.mxu0 0.0
    %2049 = vmatpush1.msra.mxu0 %v1519
    %2050 = vmatprep.subr.mxu0 0.0
    %2051 = vmatpush1.msra.mxu0 %v1518
    %2052 = vmatprep.subr.mxu0 0.0
    %2053 = vmatpush1.msra.mxu0 %v1517
    %2054 = vmatprep.subr.mxu0 0.0
    %2055 = vmatpush1.msra.mxu0 %v1516
    %2056 = vmatprep.subr.mxu0 0.0
    %2057 = vmatpush1.msra.mxu0 %v1515
    %2058 = vmatprep.subr.mxu0 0.0
    %2059 = vmatpush1.msra.mxu0 %v1514
    %2060 = vmatprep.subr.mxu0 0.0
    %2061 = vmatpush1.msra.mxu0 %v1513
    %2062 = vmatprep.subr.mxu0 0.0
    %2063 = vmatpush1.msra.mxu0 %v1512
    %2064 = vmatprep.subr.mxu0 0.0
    %2065 = vmatpush1.msra.mxu0 %v1511
    %2066 = vmatprep.subr.mxu0 0.0
    %2067 = vmatpush1.msra.mxu0 %v1510
    %2068 = vmatprep.subr.mxu0 0.0
    %2069 = vmatpush1.msra.mxu0 %v1509
    %2070 = vmatprep.subr.mxu0 0.0
    %2071 = vmatpush2.msra.mxu0 %v1540
    %2072 = vmatprep.subr.mxu0 0.0
    %2073 = vmatpush2.msra.mxu0 %v1539
    %2074 = vmatprep.subr.mxu0 0.0
    %2075 = vmatpush2.msra.mxu0 %v1538
    %2076 = vmatprep.subr.mxu0 0.0
    %2077 = vmatpush2.msra.mxu0 %v1537
    %2078 = vmatprep.subr.mxu0 0.0
    %2079 = vmatpush2.msra.mxu0 %v1536
    %2080 = vmatprep.subr.mxu0 0.0
    %2081 = vmatpush2.msra.mxu0 %v1535
    %2082 = vmatprep.subr.mxu0 0.0
    %2083 = vmatpush2.msra.mxu0 %v1534
    %2084 = vmatprep.subr.mxu0 0.0
    %2085 = vmatpush2.msra.mxu0 %v1533
    %2086 = vmatprep.subr.mxu0 0.0
    %2087 = vmatpush2.msra.mxu0 %v1532
    %2088 = vmatprep.subr.mxu0 0.0
    %2089 = vmatpush2.msra.mxu0 %v1531
    %2090 = vmatprep.subr.mxu0 0.0
    %2091 = vmatpush2.msra.mxu0 %v1530
    %2092 = vmatprep.subr.mxu0 0.0
    %2093 = vmatpush2.msra.mxu0 %v1529
    %2094 = vmatprep.subr.mxu0 0.0
    %2095 = vmatpush2.msra.mxu0 %v1528
    %2096 = vmatprep.subr.mxu0 0.0
    %2097 = vmatpush2.msra.mxu0 %v1527
    %2098 = vmatprep.subr.mxu0 0.0
    %2099 = vmatpush2.msra.mxu0 %v1526
    %2100 = vmatprep.subr.mxu0 0.0
    %2101 = vmatpush2.msra.mxu0 %v1525
    %2102 = vmatprep.mubr.f32.mxu0 %v1284
    %2103 = vmatmul.mubr.f32.gmra.mxu0 %v1283
    %v2104 = vpop.f32.mrf.mxu0
    %v2105 = vadd.f32 %v2035, %v2104
    %v2106 = vpop.f32.mrf.mxu0
    %2107 = vdwg.mxu0
    %2108 = vmax.xlane.f32.xlu0 %v2105
    %v2109 = vpop.xlane.xlu0 %2108
    %v2110 = vsub.f32 %v2105, %v2109
    %v2111 = vmul.f32 %v2110, 1.442695
    %v2112 = vpow.pop %v2111
    %v2113 = vld [vmem:[#allocation9] sm:$0xff]
    %v2114 = vld [vmem:[#allocation9 + $0x8] sm:$0xff]
    %v2115 = vld [vmem:[#allocation9 + $0x10] sm:$0xff]
    %v2116 = vld [vmem:[#allocation9 + $0x18] sm:$0xff]
    %v2117 = vld [vmem:[#allocation9 + $0x20] sm:$0xff]
    %v2118 = vld [vmem:[#allocation9 + $0x28] sm:$0xff]
    %v2119 = vld [vmem:[#allocation9 + $0x30] sm:$0xff]
    %v2120 = vld [vmem:[#allocation9 + $0x38] sm:$0xff]
    %v2121 = vld [vmem:[#allocation9 + $0x40] sm:$0xff]
    %v2122 = vld [vmem:[#allocation9 + $0x48] sm:$0xff]
    %v2123 = vld [vmem:[#allocation9 + $0x50] sm:$0xff]
    %v2124 = vld [vmem:[#allocation9 + $0x58] sm:$0xff]
    %v2125 = vld [vmem:[#allocation9 + $0x60] sm:$0xff]
    %v2126 = vld [vmem:[#allocation9 + $0x68] sm:$0xff]
    %v2127 = vld [vmem:[#allocation9 + $0x70] sm:$0xff]
    %v2128 = vld [vmem:[#allocation9 + $0x78] sm:$0xff]
    %2129 = vmatprep.subr.mxu0 0.0
    %2130 = vmatpush1.msra.mxu0 %v2128
    %2131 = vmatprep.subr.mxu0 0.0
    %2132 = vmatpush1.msra.mxu0 %v2127
    %2133 = vmatprep.subr.mxu0 0.0
    %2134 = vmatpush1.msra.mxu0 %v2126
    %2135 = vmatprep.subr.mxu0 0.0
    %2136 = vmatpush1.msra.mxu0 %v2125
    %2137 = vmatprep.subr.mxu0 0.0
    %2138 = vmatpush1.msra.mxu0 %v2124
    %2139 = vmatprep.subr.mxu0 0.0
    %2140 = vmatpush1.msra.mxu0 %v2123
    %2141 = vmatprep.subr.mxu0 0.0
    %2142 = vmatpush1.msra.mxu0 %v2122
    %2143 = vmatprep.subr.mxu0 0.0
    %2144 = vmatpush1.msra.mxu0 %v2121
    %2145 = vmatprep.subr.mxu0 0.0
    %2146 = vmatpush1.msra.mxu0 %v2120
    %2147 = vmatprep.subr.mxu0 0.0
    %2148 = vmatpush1.msra.mxu0 %v2119
    %2149 = vmatprep.subr.mxu0 0.0
    %2150 = vmatpush1.msra.mxu0 %v2118
    %2151 = vmatprep.subr.mxu0 0.0
    %2152 = vmatpush1.msra.mxu0 %v2117
    %2153 = vmatprep.subr.mxu0 0.0
    %2154 = vmatpush1.msra.mxu0 %v2116
    %2155 = vmatprep.subr.mxu0 0.0
    %2156 = vmatpush1.msra.mxu0 %v2115
    %2157 = vmatprep.subr.mxu0 0.0
    %2158 = vmatpush1.msra.mxu0 %v2114
    %2159 = vmatprep.subr.mxu0 0.0
    %2160 = vmatpush1.msra.mxu0 %v2113
    %2161 = vmatprep.subr.mxu0 0.0
    %2162 = vmatpush2.msra.mxu0 0.0
    %2163 = vmatprep.subr.mxu0 0.0
    %2164 = vmatpush2.msra.mxu0 0.0
    %2165 = vmatprep.subr.mxu0 0.0
    %2166 = vmatpush2.msra.mxu0 0.0
    %2167 = vmatprep.subr.mxu0 0.0
    %2168 = vmatpush2.msra.mxu0 0.0
    %2169 = vmatprep.subr.mxu0 0.0
    %2170 = vmatpush2.msra.mxu0 0.0
    %2171 = vmatprep.subr.mxu0 0.0
    %2172 = vmatpush2.msra.mxu0 0.0
    %2173 = vmatprep.subr.mxu0 0.0
    %2174 = vmatpush2.msra.mxu0 0.0
    %2175 = vmatprep.subr.mxu0 0.0
    %2176 = vmatpush2.msra.mxu0 0.0
    %2177 = vmatprep.subr.mxu0 0.0
    %2178 = vmatpush2.msra.mxu0 0.0
    %2179 = vmatprep.subr.mxu0 0.0
    %2180 = vmatpush2.msra.mxu0 0.0
    %2181 = vmatprep.subr.mxu0 0.0
    %2182 = vmatpush2.msra.mxu0 0.0
    %2183 = vmatprep.subr.mxu0 0.0
    %2184 = vmatpush2.msra.mxu0 0.0
    %2185 = vmatprep.subr.mxu0 0.0
    %2186 = vmatpush2.msra.mxu0 0.0
    %2187 = vmatprep.subr.mxu0 0.0
    %2188 = vmatpush2.msra.mxu0 0.0
    %2189 = vmatprep.subr.mxu0 0.0
    %2190 = vmatpush2.msra.mxu0 0.0
    %2191 = vmatprep.subr.mxu0 0.0
    %2192 = vmatpush2.msra.mxu0 0.0
    %2193 = vmatprep.mubr.f32.mxu0 0.0
    %2194 = vmatmul.mubr.f32.gmra.mxu0 %v2112
    %v2195 = vpop.f32.mrf.mxu0
    %v2196 = vadd.f32 0.0, %v2195
    %v2197 = vpop.f32.mrf.mxu0
    %2198 = vdwg.mxu0
    %v2199 = vrcp.pop %v2196
    %v2200 = vmul.f32 %v2112, %v2199
    %2201 = vst [vmem:[%s6] sm:$0xff] %v2200
    // Predicated region
    $region46: #{policy_network_forward.1} parent=1 // pred_check
      _
    $region47: #{policy_network_forward.1} parent=1 // pred_check_branch
      %2203 = sbr.rel (0) target = $region49
    $region48: #{policy_network_forward.1} parent=1 // pred_region
      _
    $region49: #{policy_network_forward.1} parent=1 // pred_fallthru
      _
    // Predicated region
    $region50: #{policy_network_forward.1} parent=1 // pred_check
      _
    $region51: #{policy_network_forward.1} parent=1 // pred_check_branch
      %2205 = sbr.rel (0) target = $region53
    $region52: #{policy_network_forward.1} parent=1 // pred_region
      _
    $region53: #{policy_network_forward.1} parent=1 // pred_fallthru
      _
    %2206 = vsyncpa [#allocation3], 1
    %2207 = vsyncpa [#allocation5], 1
    %2208 = vsyncpa [#allocation8], 1

</llo_original>
